<compile_context>
chip_gen: v6e
topology: v6e:2x2x1
jax: 0.10.0
libtpu: 0.0.40
codegen_flags: <defaults>
</compile_context>

<pallas_src>
import functools

import jax
import jax.numpy as jnp
from jax import lax
from jax.experimental import pallas as pl
from jax.experimental.pallas import tpu as pltpu


def lstm_clas_kernel(x_ref, wih0_ref, whh0_ref, b0_ref,
                     wih1_ref, whh1_ref, b1_ref,
                     wlin_ref, blin_ref, out_ref):
    """Two-layer LSTM + fused flatten/linear, fully unrolled over T.

    x_ref    : (T*B, F) bf16  time-major input, row t*B + b = x[b, t, :]
    wih0_ref : (F, 4H)  bf16  gate order [i, f, o, g]
    whh0_ref : (H, 4H)  bf16
    b0_ref   : (1, 4H)  f32   bih0 + bhh0, reordered
    wih1_ref : (H, 4H)  bf16
    whh1_ref : (H, 4H)  bf16
    b1_ref   : (1, 4H)  f32
    wlin_ref : (T*H, C) bf16  classifier weight, flatten order t*H + h
    blin_ref : (1, C)   f32
    out_ref  : (B, C)   f32
    """
    TB, _ = x_ref.shape
    H = whh0_ref.shape[0]
    B, C = out_ref.shape
    T = TB // B
    bf16 = jnp.bfloat16

    # Hoist loop-invariant loads / broadcasts out of the recurrence.
    whh0 = whh0_ref[...]
    wih1 = wih1_ref[...]
    whh1 = whh1_ref[...]
    b1 = jnp.broadcast_to(b1_ref[...], (B, 4 * H))

    # Layer-0 input projection for ALL timesteps, completely off the serial
    # chain: (T*B, F) @ (F, 4H) + b0 -> (T*B, 4H) f32.
    gates0_pre = (jnp.dot(x_ref[...], wih0_ref[...],
                          preferred_element_type=jnp.float32)
                  + b0_ref[...])

    def nonlin(gates, c):
        # Gate order [i, f, o, g]: one 3H-wide sigmoid + one H-wide tanh.
        ifo = jax.nn.sigmoid(gates[:, :3 * H])
        g = jnp.tanh(gates[:, 3 * H:])
        i = ifo[:, :H]
        f = ifo[:, H:2 * H]
        o = ifo[:, 2 * H:3 * H]
        c_new = f * c + i * g
        h_new = o * jnp.tanh(c_new)
        return h_new, c_new

    zeros = jnp.zeros((B, H), jnp.float32)
    h0, c0, h1, c1 = zeros, zeros, zeros, zeros
    out_acc = jnp.zeros((B, C), jnp.float32)

    # T is small and static: full Python unroll keeps state in vregs and lets
    # the scheduler overlap layer-0 of step t+1 with layer-1 of step t.
    for t in range(T):
        # Layer 0: only the recurrent matmul sits on the h0 chain.
        g0 = gates0_pre[t * B:(t + 1) * B, :] + jnp.dot(
            h0.astype(bf16), whh0, preferred_element_type=jnp.float32)
        h0, c0 = nonlin(g0, c0)

        # Layer 1: input branch (depends only on h0) is off the h1 chain.
        x1 = jnp.dot(h0.astype(bf16), wih1,
                     preferred_element_type=jnp.float32) + b1
        g1 = x1 + jnp.dot(h1.astype(bf16), whh1,
                          preferred_element_type=jnp.float32)
        h1, c1 = nonlin(g1, c1)

        # Classifier contribution of this step: tiny (B,H)@(H,C) MXU op that
        # hides under the EUP/VPU-heavy recurrence. Replaces the hist scratch.
        out_acc = out_acc + jnp.dot(
            h1.astype(bf16), wlin_ref[t * H:(t + 1) * H, :],
            preferred_element_type=jnp.float32)

    out_ref[...] = out_acc + blin_ref[...]


def audio_model_clas_forward(x, params):
    """x: (B, T, F) float32 batch_first, like the PyTorch module."""
    B, T, F = x.shape
    H = params['whh0'].shape[1]
    C = params['blin'].shape[0]
    bf16 = jnp.bfloat16

    def reorder(w):
        # PyTorch gate order [i, f, g, o] -> kernel order [i, f, o, g] (axis 0).
        i, f, g, o = jnp.split(w, 4, axis=0)
        return jnp.concatenate([i, f, o, g], axis=0)

    # Time-major, flattened to (T*B, F) in the wrapper so the kernel's
    # batched pre-projection is pure layout plumbing (no in-kernel reshape).
    x_flat = jnp.transpose(x, (1, 0, 2)).reshape(T * B, F).astype(bf16)

    wih0 = reorder(params['wih0']).T.astype(bf16)    # (F, 4H)
    whh0 = reorder(params['whh0']).T.astype(bf16)    # (H, 4H)
    wih1 = reorder(params['wih1']).T.astype(bf16)    # (H, 4H)
    whh1 = reorder(params['whh1']).T.astype(bf16)    # (H, 4H)
    b0 = reorder(params['bih0'] + params['bhh0']).reshape(1, 4 * H)   # f32
    b1 = reorder(params['bih1'] + params['bhh1']).reshape(1, 4 * H)   # f32
    wlin = params['wlin'].T.astype(bf16)             # (T*H, C), order t*H + h
    blin = params['blin'].reshape(1, C)              # f32

    vmem = functools.partial(pl.BlockSpec, memory_space=pltpu.MemorySpace.VMEM)
    return pl.pallas_call(
        lstm_clas_kernel,
        out_shape=jax.ShapeDtypeStruct((B, C), jnp.float32),
        in_specs=[vmem()] * 9,
        out_specs=vmem(),
    )(x_flat, wih0, whh0, b0, wih1, whh1, b1, wlin, blin)


def reference_forward(x, params):
    """Pure-JAX f32 reference matching torch.nn.LSTM + Flatten + Linear."""
    B, T, F = x.shape
    H = params['whh0'].shape[1]

    def lstm_layer(seq, wih, whh, bih, bhh):
        def step(carry, x_t):
            h, c = carry
            gates = x_t @ wih.T + bih + h @ whh.T + bhh
            i, f, g, o = jnp.split(gates, 4, axis=-1)
            i = jax.nn.sigmoid(i)
            f = jax.nn.sigmoid(f)
            g = jnp.tanh(g)
            o = jax.nn.sigmoid(o)
            c = f * c + i * g
            h = o * jnp.tanh(c)
            return (h, c), h

        init = (jnp.zeros((B, H), jnp.float32), jnp.zeros((B, H), jnp.float32))
        _, ys = lax.scan(step, init, jnp.transpose(seq, (1, 0, 2)))
        return jnp.transpose(ys, (1, 0, 2))

    y = lstm_layer(x, params['wih0'], params['whh0'], params['bih0'], params['bhh0'])
    y = lstm_layer(y, params['wih1'], params['whh1'], params['bih1'], params['bhh1'])
    flat = y.reshape(B, T * H)
    return flat @ params['wlin'].T + params['blin']


def init_params(key, num_features, num_hidden, num_class, length):
    H, F, C, T = num_hidden, num_features, num_class, length
    k = jax.random.split(key, 10)
    s = 1.0 / jnp.sqrt(H)

    def u(kk, shape):
        return jax.random.uniform(kk, shape, jnp.float32, -s, s)

    return {
        'wih0': u(k[0], (4 * H, F)), 'whh0': u(k[1], (4 * H, H)),
        'bih0': u(k[2], (4 * H,)),   'bhh0': u(k[3], (4 * H,)),
        'wih1': u(k[4], (4 * H, H)), 'whh1': u(k[5], (4 * H, H)),
        'bih1': u(k[6], (4 * H,)),   'bhh1': u(k[7], (4 * H,)),
        'wlin': u(k[8], (C, H * T)), 'blin': u(k[9], (C,)),
    }


if __name__ == "__main__":
    # Small shapes consistent with the module: batch=2, seq(length)=8,
    # num_features=8, num_hidden=32, num_class=4.
    # TODO(synk): PackedSequence input path (pad_packed_sequence) has no Pallas
    # equivalent; dense (B, T, F) input only.
    B, T, F, H, C = 2, 8, 8, 32, 4

    key = jax.random.PRNGKey(0)
    k_x, k_p = jax.random.split(key)
    x = jax.random.normal(k_x, (B, T, F), jnp.float32)
    params = init_params(k_p, num_features=F, num_hidden=H, num_class=C, length=T)

    out = audio_model_clas_forward(x, params)
    out = jax.block_until_ready(out)

    ref = reference_forward(x, params)
    assert out.shape == (B, C), out.shape
    # Tolerance relaxed vs. the pure-f32 variant: kernel matmuls use bf16
    # operands (f32 accumulation, f32 gates/state) vs. an all-f32 reference.
    assert jnp.allclose(out, ref, atol=2e-2, rtol=2e-2), (out, ref)

    print("KERNEL_OK")
</pallas_src>

<mosaic_0001>
module attributes {stable_mosaic.version = 11 : i64} {
  func.func @lstm_clas_kernel(%arg0: memref<16x8xbf16, #tpu.memory_space<vmem>>, %arg1: memref<8x128xbf16, #tpu.memory_space<vmem>>, %arg2: memref<32x128xbf16, #tpu.memory_space<vmem>>, %arg3: memref<1x128xf32, #tpu.memory_space<vmem>>, %arg4: memref<32x128xbf16, #tpu.memory_space<vmem>>, %arg5: memref<32x128xbf16, #tpu.memory_space<vmem>>, %arg6: memref<1x128xf32, #tpu.memory_space<vmem>>, %arg7: memref<256x4xbf16, #tpu.memory_space<vmem>>, %arg8: memref<1x4xf32, #tpu.memory_space<vmem>>, %arg9: memref<2x4xf32, #tpu.memory_space<vmem>>) attributes {dimension_semantics = [], scalar_prefetch = 0 : i64, scratch_operands = 0 : i64, tpu.core_type = #tpu.core_type<tc>} {
    %c0 = arith.constant 0 : index
    %c0_0 = arith.constant 0 : index
    %0 = vector.load %arg2[%c0, %c0_0] : memref<32x128xbf16, #tpu.memory_space<vmem>>, vector<32x128xbf16>
    %c0_1 = arith.constant 0 : index
    %c0_2 = arith.constant 0 : index
    %1 = vector.load %arg4[%c0_1, %c0_2] : memref<32x128xbf16, #tpu.memory_space<vmem>>, vector<32x128xbf16>
    %c0_3 = arith.constant 0 : index
    %c0_4 = arith.constant 0 : index
    %2 = vector.load %arg5[%c0_3, %c0_4] : memref<32x128xbf16, #tpu.memory_space<vmem>>, vector<32x128xbf16>
    %c0_5 = arith.constant 0 : index
    %c0_6 = arith.constant 0 : index
    %3 = vector.load %arg6[%c0_5, %c0_6] : memref<1x128xf32, #tpu.memory_space<vmem>>, vector<1x128xf32>
    %4 = vector.shape_cast %3 : vector<1x128xf32> to vector<1x128xf32>
    %5 = vector.broadcast %4 : vector<1x128xf32> to vector<2x128xf32>
    %c0_7 = arith.constant 0 : index
    %c0_8 = arith.constant 0 : index
    %6 = vector.load %arg0[%c0_7, %c0_8] : memref<16x8xbf16, #tpu.memory_space<vmem>>, vector<16x8xbf16>
    %c0_9 = arith.constant 0 : index
    %c0_10 = arith.constant 0 : index
    %7 = vector.load %arg1[%c0_9, %c0_10] : memref<8x128xbf16, #tpu.memory_space<vmem>>, vector<8x128xbf16>
    %cst = arith.constant dense<0.000000e+00> : vector<16x128xf32>
    %8 = tpu.matmul %6, %7, %cst {dimension_numbers = #tpu.dot_dimension_numbers<[1], [0], [0], [1], [0, 0, 1, 1], [], []>} : vector<16x8xbf16>, vector<8x128xbf16>, vector<16x128xf32> -> vector<16x128xf32>
    %c0_11 = arith.constant 0 : index
    %c0_12 = arith.constant 0 : index
    %9 = vector.load %arg3[%c0_11, %c0_12] : memref<1x128xf32, #tpu.memory_space<vmem>>, vector<1x128xf32>
    %10 = vector.broadcast %9 : vector<1x128xf32> to vector<16x128xf32>
    %11 = arith.addf %8, %10 : vector<16x128xf32>
    %cst_13 = arith.constant 0.000000e+00 : f32
    %12 = vector.broadcast %cst_13 : f32 to vector<2x32xf32>
    %cst_14 = arith.constant 0.000000e+00 : f32
    %13 = vector.broadcast %cst_14 : f32 to vector<2x4xf32>
    %14 = vector.extract_strided_slice %11 {offsets = [0, 0], sizes = [2, 128], strides = [1, 1]} : vector<16x128xf32> to vector<2x128xf32>
    %15 = arith.truncf %12 : vector<2x32xf32> to vector<2x32xbf16>
    %cst_15 = arith.constant dense<0.000000e+00> : vector<2x128xf32>
    %16 = tpu.matmul %15, %0, %cst_15 {dimension_numbers = #tpu.dot_dimension_numbers<[1], [0], [0], [1], [0, 0, 1, 1], [], []>} : vector<2x32xbf16>, vector<32x128xbf16>, vector<2x128xf32> -> vector<2x128xf32>
    %17 = arith.addf %14, %16 : vector<2x128xf32>
    %18 = vector.extract_strided_slice %17 {offsets = [0, 0], sizes = [2, 96], strides = [1, 1]} : vector<2x128xf32> to vector<2x96xf32>
    %19 = arith.negf %18 : vector<2x96xf32>
    %20 = math.exp %19 : vector<2x96xf32>
    %cst_16 = arith.constant 1.000000e+00 : f32
    %21 = vector.broadcast %cst_16 : f32 to vector<2x96xf32>
    %22 = arith.addf %21, %20 : vector<2x96xf32>
    %23 = arith.divf %21, %22 : vector<2x96xf32>
    %24 = vector.extract_strided_slice %17 {offsets = [0, 96], sizes = [2, 32], strides = [1, 1]} : vector<2x128xf32> to vector<2x32xf32>
    %25 = math.tanh %24 : vector<2x32xf32>
    %26 = vector.extract_strided_slice %23 {offsets = [0, 0], sizes = [2, 32], strides = [1, 1]} : vector<2x96xf32> to vector<2x32xf32>
    %27 = vector.extract_strided_slice %23 {offsets = [0, 32], sizes = [2, 32], strides = [1, 1]} : vector<2x96xf32> to vector<2x32xf32>
    %28 = vector.extract_strided_slice %23 {offsets = [0, 64], sizes = [2, 32], strides = [1, 1]} : vector<2x96xf32> to vector<2x32xf32>
    %29 = arith.mulf %27, %12 : vector<2x32xf32>
    %30 = arith.mulf %26, %25 : vector<2x32xf32>
    %31 = arith.addf %29, %30 : vector<2x32xf32>
    %32 = math.tanh %31 : vector<2x32xf32>
    %33 = arith.mulf %28, %32 : vector<2x32xf32>
    %34 = arith.truncf %33 : vector<2x32xf32> to vector<2x32xbf16>
    %cst_17 = arith.constant dense<0.000000e+00> : vector<2x128xf32>
    %35 = tpu.matmul %34, %1, %cst_17 {dimension_numbers = #tpu.dot_dimension_numbers<[1], [0], [0], [1], [0, 0, 1, 1], [], []>} : vector<2x32xbf16>, vector<32x128xbf16>, vector<2x128xf32> -> vector<2x128xf32>
    %36 = arith.addf %35, %5 : vector<2x128xf32>
    %37 = arith.truncf %12 : vector<2x32xf32> to vector<2x32xbf16>
    %cst_18 = arith.constant dense<0.000000e+00> : vector<2x128xf32>
    %38 = tpu.matmul %37, %2, %cst_18 {dimension_numbers = #tpu.dot_dimension_numbers<[1], [0], [0], [1], [0, 0, 1, 1], [], []>} : vector<2x32xbf16>, vector<32x128xbf16>, vector<2x128xf32> -> vector<2x128xf32>
    %39 = arith.addf %36, %38 : vector<2x128xf32>
    %40 = vector.extract_strided_slice %39 {offsets = [0, 0], sizes = [2, 96], strides = [1, 1]} : vector<2x128xf32> to vector<2x96xf32>
    %41 = arith.negf %40 : vector<2x96xf32>
    %42 = math.exp %41 : vector<2x96xf32>
    %cst_19 = arith.constant 1.000000e+00 : f32
    %43 = vector.broadcast %cst_19 : f32 to vector<2x96xf32>
    %44 = arith.addf %43, %42 : vector<2x96xf32>
    %45 = arith.divf %43, %44 : vector<2x96xf32>
    %46 = vector.extract_strided_slice %39 {offsets = [0, 96], sizes = [2, 32], strides = [1, 1]} : vector<2x128xf32> to vector<2x32xf32>
    %47 = math.tanh %46 : vector<2x32xf32>
    %48 = vector.extract_strided_slice %45 {offsets = [0, 0], sizes = [2, 32], strides = [1, 1]} : vector<2x96xf32> to vector<2x32xf32>
    %49 = vector.extract_strided_slice %45 {offsets = [0, 32], sizes = [2, 32], strides = [1, 1]} : vector<2x96xf32> to vector<2x32xf32>
    %50 = vector.extract_strided_slice %45 {offsets = [0, 64], sizes = [2, 32], strides = [1, 1]} : vector<2x96xf32> to vector<2x32xf32>
    %51 = arith.mulf %49, %12 : vector<2x32xf32>
    %52 = arith.mulf %48, %47 : vector<2x32xf32>
    %53 = arith.addf %51, %52 : vector<2x32xf32>
    %54 = math.tanh %53 : vector<2x32xf32>
    %55 = arith.mulf %50, %54 : vector<2x32xf32>
    %56 = arith.truncf %55 : vector<2x32xf32> to vector<2x32xbf16>
    %c0_20 = arith.constant 0 : index
    %c0_21 = arith.constant 0 : index
    %57 = vector.load %arg7[%c0_20, %c0_21] : memref<256x4xbf16, #tpu.memory_space<vmem>>, vector<32x4xbf16>
    %cst_22 = arith.constant dense<0.000000e+00> : vector<2x4xf32>
    %58 = tpu.matmul %56, %57, %cst_22 {dimension_numbers = #tpu.dot_dimension_numbers<[1], [0], [0], [1], [0, 0, 1, 1], [], []>} : vector<2x32xbf16>, vector<32x4xbf16>, vector<2x4xf32> -> vector<2x4xf32>
    %59 = arith.addf %13, %58 : vector<2x4xf32>
    %60 = vector.extract_strided_slice %11 {offsets = [2, 0], sizes = [2, 128], strides = [1, 1]} : vector<16x128xf32> to vector<2x128xf32>
    %61 = arith.truncf %33 : vector<2x32xf32> to vector<2x32xbf16>
    %cst_23 = arith.constant dense<0.000000e+00> : vector<2x128xf32>
    %62 = tpu.matmul %61, %0, %cst_23 {dimension_numbers = #tpu.dot_dimension_numbers<[1], [0], [0], [1], [0, 0, 1, 1], [], []>} : vector<2x32xbf16>, vector<32x128xbf16>, vector<2x128xf32> -> vector<2x128xf32>
    %63 = arith.addf %60, %62 : vector<2x128xf32>
    %64 = vector.extract_strided_slice %63 {offsets = [0, 0], sizes = [2, 96], strides = [1, 1]} : vector<2x128xf32> to vector<2x96xf32>
    %65 = arith.negf %64 : vector<2x96xf32>
    %66 = math.exp %65 : vector<2x96xf32>
    %cst_24 = arith.constant 1.000000e+00 : f32
    %67 = vector.broadcast %cst_24 : f32 to vector<2x96xf32>
    %68 = arith.addf %67, %66 : vector<2x96xf32>
    %69 = arith.divf %67, %68 : vector<2x96xf32>
    %70 = vector.extract_strided_slice %63 {offsets = [0, 96], sizes = [2, 32], strides = [1, 1]} : vector<2x128xf32> to vector<2x32xf32>
    %71 = math.tanh %70 : vector<2x32xf32>
    %72 = vector.extract_strided_slice %69 {offsets = [0, 0], sizes = [2, 32], strides = [1, 1]} : vector<2x96xf32> to vector<2x32xf32>
    %73 = vector.extract_strided_slice %69 {offsets = [0, 32], sizes = [2, 32], strides = [1, 1]} : vector<2x96xf32> to vector<2x32xf32>
    %74 = vector.extract_strided_slice %69 {offsets = [0, 64], sizes = [2, 32], strides = [1, 1]} : vector<2x96xf32> to vector<2x32xf32>
    %75 = arith.mulf %73, %31 : vector<2x32xf32>
    %76 = arith.mulf %72, %71 : vector<2x32xf32>
    %77 = arith.addf %75, %76 : vector<2x32xf32>
    %78 = math.tanh %77 : vector<2x32xf32>
    %79 = arith.mulf %74, %78 : vector<2x32xf32>
    %80 = arith.truncf %79 : vector<2x32xf32> to vector<2x32xbf16>
    %cst_25 = arith.constant dense<0.000000e+00> : vector<2x128xf32>
    %81 = tpu.matmul %80, %1, %cst_25 {dimension_numbers = #tpu.dot_dimension_numbers<[1], [0], [0], [1], [0, 0, 1, 1], [], []>} : vector<2x32xbf16>, vector<32x128xbf16>, vector<2x128xf32> -> vector<2x128xf32>
    %82 = arith.addf %81, %5 : vector<2x128xf32>
    %83 = arith.truncf %55 : vector<2x32xf32> to vector<2x32xbf16>
    %cst_26 = arith.constant dense<0.000000e+00> : vector<2x128xf32>
    %84 = tpu.matmul %83, %2, %cst_26 {dimension_numbers = #tpu.dot_dimension_numbers<[1], [0], [0], [1], [0, 0, 1, 1], [], []>} : vector<2x32xbf16>, vector<32x128xbf16>, vector<2x128xf32> -> vector<2x128xf32>
    %85 = arith.addf %82, %84 : vector<2x128xf32>
    %86 = vector.extract_strided_slice %85 {offsets = [0, 0], sizes = [2, 96], strides = [1, 1]} : vector<2x128xf32> to vector<2x96xf32>
    %87 = arith.negf %86 : vector<2x96xf32>
    %88 = math.exp %87 : vector<2x96xf32>
    %cst_27 = arith.constant 1.000000e+00 : f32
    %89 = vector.broadcast %cst_27 : f32 to vector<2x96xf32>
    %90 = arith.addf %89, %88 : vector<2x96xf32>
    %91 = arith.divf %89, %90 : vector<2x96xf32>
    %92 = vector.extract_strided_slice %85 {offsets = [0, 96], sizes = [2, 32], strides = [1, 1]} : vector<2x128xf32> to vector<2x32xf32>
    %93 = math.tanh %92 : vector<2x32xf32>
    %94 = vector.extract_strided_slice %91 {offsets = [0, 0], sizes = [2, 32], strides = [1, 1]} : vector<2x96xf32> to vector<2x32xf32>
    %95 = vector.extract_strided_slice %91 {offsets = [0, 32], sizes = [2, 32], strides = [1, 1]} : vector<2x96xf32> to vector<2x32xf32>
    %96 = vector.extract_strided_slice %91 {offsets = [0, 64], sizes = [2, 32], strides = [1, 1]} : vector<2x96xf32> to vector<2x32xf32>
    %97 = arith.mulf %95, %53 : vector<2x32xf32>
    %98 = arith.mulf %94, %93 : vector<2x32xf32>
    %99 = arith.addf %97, %98 : vector<2x32xf32>
    %100 = math.tanh %99 : vector<2x32xf32>
    %101 = arith.mulf %96, %100 : vector<2x32xf32>
    %102 = arith.truncf %101 : vector<2x32xf32> to vector<2x32xbf16>
    %c32 = arith.constant 32 : index
    %c0_28 = arith.constant 0 : index
    %103 = vector.load %arg7[%c32, %c0_28] : memref<256x4xbf16, #tpu.memory_space<vmem>>, vector<32x4xbf16>
    %cst_29 = arith.constant dense<0.000000e+00> : vector<2x4xf32>
    %104 = tpu.matmul %102, %103, %cst_29 {dimension_numbers = #tpu.dot_dimension_numbers<[1], [0], [0], [1], [0, 0, 1, 1], [], []>} : vector<2x32xbf16>, vector<32x4xbf16>, vector<2x4xf32> -> vector<2x4xf32>
    %105 = arith.addf %59, %104 : vector<2x4xf32>
    %106 = vector.extract_strided_slice %11 {offsets = [4, 0], sizes = [2, 128], strides = [1, 1]} : vector<16x128xf32> to vector<2x128xf32>
    %107 = arith.truncf %79 : vector<2x32xf32> to vector<2x32xbf16>
    %cst_30 = arith.constant dense<0.000000e+00> : vector<2x128xf32>
    %108 = tpu.matmul %107, %0, %cst_30 {dimension_numbers = #tpu.dot_dimension_numbers<[1], [0], [0], [1], [0, 0, 1, 1], [], []>} : vector<2x32xbf16>, vector<32x128xbf16>, vector<2x128xf32> -> vector<2x128xf32>
    %109 = arith.addf %106, %108 : vector<2x128xf32>
    %110 = vector.extract_strided_slice %109 {offsets = [0, 0], sizes = [2, 96], strides = [1, 1]} : vector<2x128xf32> to vector<2x96xf32>
    %111 = arith.negf %110 : vector<2x96xf32>
    %112 = math.exp %111 : vector<2x96xf32>
    %cst_31 = arith.constant 1.000000e+00 : f32
    %113 = vector.broadcast %cst_31 : f32 to vector<2x96xf32>
    %114 = arith.addf %113, %112 : vector<2x96xf32>
    %115 = arith.divf %113, %114 : vector<2x96xf32>
    %116 = vector.extract_strided_slice %109 {offsets = [0, 96], sizes = [2, 32], strides = [1, 1]} : vector<2x128xf32> to vector<2x32xf32>
    %117 = math.tanh %116 : vector<2x32xf32>
    %118 = vector.extract_strided_slice %115 {offsets = [0, 0], sizes = [2, 32], strides = [1, 1]} : vector<2x96xf32> to vector<2x32xf32>
    %119 = vector.extract_strided_slice %115 {offsets = [0, 32], sizes = [2, 32], strides = [1, 1]} : vector<2x96xf32> to vector<2x32xf32>
    %120 = vector.extract_strided_slice %115 {offsets = [0, 64], sizes = [2, 32], strides = [1, 1]} : vector<2x96xf32> to vector<2x32xf32>
    %121 = arith.mulf %119, %77 : vector<2x32xf32>
    %122 = arith.mulf %118, %117 : vector<2x32xf32>
    %123 = arith.addf %121, %122 : vector<2x32xf32>
    %124 = math.tanh %123 : vector<2x32xf32>
    %125 = arith.mulf %120, %124 : vector<2x32xf32>
    %126 = arith.truncf %125 : vector<2x32xf32> to vector<2x32xbf16>
    %cst_32 = arith.constant dense<0.000000e+00> : vector<2x128xf32>
    %127 = tpu.matmul %126, %1, %cst_32 {dimension_numbers = #tpu.dot_dimension_numbers<[1], [0], [0], [1], [0, 0, 1, 1], [], []>} : vector<2x32xbf16>, vector<32x128xbf16>, vector<2x128xf32> -> vector<2x128xf32>
    %128 = arith.addf %127, %5 : vector<2x128xf32>
    %129 = arith.truncf %101 : vector<2x32xf32> to vector<2x32xbf16>
    %cst_33 = arith.constant dense<0.000000e+00> : vector<2x128xf32>
    %130 = tpu.matmul %129, %2, %cst_33 {dimension_numbers = #tpu.dot_dimension_numbers<[1], [0], [0], [1], [0, 0, 1, 1], [], []>} : vector<2x32xbf16>, vector<32x128xbf16>, vector<2x128xf32> -> vector<2x128xf32>
    %131 = arith.addf %128, %130 : vector<2x128xf32>
    %132 = vector.extract_strided_slice %131 {offsets = [0, 0], sizes = [2, 96], strides = [1, 1]} : vector<2x128xf32> to vector<2x96xf32>
    %133 = arith.negf %132 : vector<2x96xf32>
    %134 = math.exp %133 : vector<2x96xf32>
    %cst_34 = arith.constant 1.000000e+00 : f32
    %135 = vector.broadcast %cst_34 : f32 to vector<2x96xf32>
    %136 = arith.addf %135, %134 : vector<2x96xf32>
    %137 = arith.divf %135, %136 : vector<2x96xf32>
    %138 = vector.extract_strided_slice %131 {offsets = [0, 96], sizes = [2, 32], strides = [1, 1]} : vector<2x128xf32> to vector<2x32xf32>
    %139 = math.tanh %138 : vector<2x32xf32>
    %140 = vector.extract_strided_slice %137 {offsets = [0, 0], sizes = [2, 32], strides = [1, 1]} : vector<2x96xf32> to vector<2x32xf32>
    %141 = vector.extract_strided_slice %137 {offsets = [0, 32], sizes = [2, 32], strides = [1, 1]} : vector<2x96xf32> to vector<2x32xf32>
    %142 = vector.extract_strided_slice %137 {offsets = [0, 64], sizes = [2, 32], strides = [1, 1]} : vector<2x96xf32> to vector<2x32xf32>
    %143 = arith.mulf %141, %99 : vector<2x32xf32>
    %144 = arith.mulf %140, %139 : vector<2x32xf32>
    %145 = arith.addf %143, %144 : vector<2x32xf32>
    %146 = math.tanh %145 : vector<2x32xf32>
    %147 = arith.mulf %142, %146 : vector<2x32xf32>
    %148 = arith.truncf %147 : vector<2x32xf32> to vector<2x32xbf16>
    %c64 = arith.constant 64 : index
    %c0_35 = arith.constant 0 : index
    %149 = vector.load %arg7[%c64, %c0_35] : memref<256x4xbf16, #tpu.memory_space<vmem>>, vector<32x4xbf16>
    %cst_36 = arith.constant dense<0.000000e+00> : vector<2x4xf32>
    %150 = tpu.matmul %148, %149, %cst_36 {dimension_numbers = #tpu.dot_dimension_numbers<[1], [0], [0], [1], [0, 0, 1, 1], [], []>} : vector<2x32xbf16>, vector<32x4xbf16>, vector<2x4xf32> -> vector<2x4xf32>
    %151 = arith.addf %105, %150 : vector<2x4xf32>
    %152 = vector.extract_strided_slice %11 {offsets = [6, 0], sizes = [2, 128], strides = [1, 1]} : vector<16x128xf32> to vector<2x128xf32>
    %153 = arith.truncf %125 : vector<2x32xf32> to vector<2x32xbf16>
    %cst_37 = arith.constant dense<0.000000e+00> : vector<2x128xf32>
    %154 = tpu.matmul %153, %0, %cst_37 {dimension_numbers = #tpu.dot_dimension_numbers<[1], [0], [0], [1], [0, 0, 1, 1], [], []>} : vector<2x32xbf16>, vector<32x128xbf16>, vector<2x128xf32> -> vector<2x128xf32>
    %155 = arith.addf %152, %154 : vector<2x128xf32>
    %156 = vector.extract_strided_slice %155 {offsets = [0, 0], sizes = [2, 96], strides = [1, 1]} : vector<2x128xf32> to vector<2x96xf32>
    %157 = arith.negf %156 : vector<2x96xf32>
    %158 = math.exp %157 : vector<2x96xf32>
    %cst_38 = arith.constant 1.000000e+00 : f32
    %159 = vector.broadcast %cst_38 : f32 to vector<2x96xf32>
    %160 = arith.addf %159, %158 : vector<2x96xf32>
    %161 = arith.divf %159, %160 : vector<2x96xf32>
    %162 = vector.extract_strided_slice %155 {offsets = [0, 96], sizes = [2, 32], strides = [1, 1]} : vector<2x128xf32> to vector<2x32xf32>
    %163 = math.tanh %162 : vector<2x32xf32>
    %164 = vector.extract_strided_slice %161 {offsets = [0, 0], sizes = [2, 32], strides = [1, 1]} : vector<2x96xf32> to vector<2x32xf32>
    %165 = vector.extract_strided_slice %161 {offsets = [0, 32], sizes = [2, 32], strides = [1, 1]} : vector<2x96xf32> to vector<2x32xf32>
    %166 = vector.extract_strided_slice %161 {offsets = [0, 64], sizes = [2, 32], strides = [1, 1]} : vector<2x96xf32> to vector<2x32xf32>
    %167 = arith.mulf %165, %123 : vector<2x32xf32>
    %168 = arith.mulf %164, %163 : vector<2x32xf32>
    %169 = arith.addf %167, %168 : vector<2x32xf32>
    %170 = math.tanh %169 : vector<2x32xf32>
    %171 = arith.mulf %166, %170 : vector<2x32xf32>
    %172 = arith.truncf %171 : vector<2x32xf32> to vector<2x32xbf16>
    %cst_39 = arith.constant dense<0.000000e+00> : vector<2x128xf32>
    %173 = tpu.matmul %172, %1, %cst_39 {dimension_numbers = #tpu.dot_dimension_numbers<[1], [0], [0], [1], [0, 0, 1, 1], [], []>} : vector<2x32xbf16>, vector<32x128xbf16>, vector<2x128xf32> -> vector<2x128xf32>
    %174 = arith.addf %173, %5 : vector<2x128xf32>
    %175 = arith.truncf %147 : vector<2x32xf32> to vector<2x32xbf16>
    %cst_40 = arith.constant dense<0.000000e+00> : vector<2x128xf32>
    %176 = tpu.matmul %175, %2, %cst_40 {dimension_numbers = #tpu.dot_dimension_numbers<[1], [0], [0], [1], [0, 0, 1, 1], [], []>} : vector<2x32xbf16>, vector<32x128xbf16>, vector<2x128xf32> -> vector<2x128xf32>
    %177 = arith.addf %174, %176 : vector<2x128xf32>
    %178 = vector.extract_strided_slice %177 {offsets = [0, 0], sizes = [2, 96], strides = [1, 1]} : vector<2x128xf32> to vector<2x96xf32>
    %179 = arith.negf %178 : vector<2x96xf32>
    %180 = math.exp %179 : vector<2x96xf32>
    %cst_41 = arith.constant 1.000000e+00 : f32
    %181 = vector.broadcast %cst_41 : f32 to vector<2x96xf32>
    %182 = arith.addf %181, %180 : vector<2x96xf32>
    %183 = arith.divf %181, %182 : vector<2x96xf32>
    %184 = vector.extract_strided_slice %177 {offsets = [0, 96], sizes = [2, 32], strides = [1, 1]} : vector<2x128xf32> to vector<2x32xf32>
    %185 = math.tanh %184 : vector<2x32xf32>
    %186 = vector.extract_strided_slice %183 {offsets = [0, 0], sizes = [2, 32], strides = [1, 1]} : vector<2x96xf32> to vector<2x32xf32>
    %187 = vector.extract_strided_slice %183 {offsets = [0, 32], sizes = [2, 32], strides = [1, 1]} : vector<2x96xf32> to vector<2x32xf32>
    %188 = vector.extract_strided_slice %183 {offsets = [0, 64], sizes = [2, 32], strides = [1, 1]} : vector<2x96xf32> to vector<2x32xf32>
    %189 = arith.mulf %187, %145 : vector<2x32xf32>
    %190 = arith.mulf %186, %185 : vector<2x32xf32>
    %191 = arith.addf %189, %190 : vector<2x32xf32>
    %192 = math.tanh %191 : vector<2x32xf32>
    %193 = arith.mulf %188, %192 : vector<2x32xf32>
    %194 = arith.truncf %193 : vector<2x32xf32> to vector<2x32xbf16>
    %c96 = arith.constant 96 : index
    %c0_42 = arith.constant 0 : index
    %195 = vector.load %arg7[%c96, %c0_42] : memref<256x4xbf16, #tpu.memory_space<vmem>>, vector<32x4xbf16>
    %cst_43 = arith.constant dense<0.000000e+00> : vector<2x4xf32>
    %196 = tpu.matmul %194, %195, %cst_43 {dimension_numbers = #tpu.dot_dimension_numbers<[1], [0], [0], [1], [0, 0, 1, 1], [], []>} : vector<2x32xbf16>, vector<32x4xbf16>, vector<2x4xf32> -> vector<2x4xf32>
    %197 = arith.addf %151, %196 : vector<2x4xf32>
    %198 = vector.extract_strided_slice %11 {offsets = [8, 0], sizes = [2, 128], strides = [1, 1]} : vector<16x128xf32> to vector<2x128xf32>
    %199 = arith.truncf %171 : vector<2x32xf32> to vector<2x32xbf16>
    %cst_44 = arith.constant dense<0.000000e+00> : vector<2x128xf32>
    %200 = tpu.matmul %199, %0, %cst_44 {dimension_numbers = #tpu.dot_dimension_numbers<[1], [0], [0], [1], [0, 0, 1, 1], [], []>} : vector<2x32xbf16>, vector<32x128xbf16>, vector<2x128xf32> -> vector<2x128xf32>
    %201 = arith.addf %198, %200 : vector<2x128xf32>
    %202 = vector.extract_strided_slice %201 {offsets = [0, 0], sizes = [2, 96], strides = [1, 1]} : vector<2x128xf32> to vector<2x96xf32>
    %203 = arith.negf %202 : vector<2x96xf32>
    %204 = math.exp %203 : vector<2x96xf32>
    %cst_45 = arith.constant 1.000000e+00 : f32
    %205 = vector.broadcast %cst_45 : f32 to vector<2x96xf32>
    %206 = arith.addf %205, %204 : vector<2x96xf32>
    %207 = arith.divf %205, %206 : vector<2x96xf32>
    %208 = vector.extract_strided_slice %201 {offsets = [0, 96], sizes = [2, 32], strides = [1, 1]} : vector<2x128xf32> to vector<2x32xf32>
    %209 = math.tanh %208 : vector<2x32xf32>
    %210 = vector.extract_strided_slice %207 {offsets = [0, 0], sizes = [2, 32], strides = [1, 1]} : vector<2x96xf32> to vector<2x32xf32>
    %211 = vector.extract_strided_slice %207 {offsets = [0, 32], sizes = [2, 32], strides = [1, 1]} : vector<2x96xf32> to vector<2x32xf32>
    %212 = vector.extract_strided_slice %207 {offsets = [0, 64], sizes = [2, 32], strides = [1, 1]} : vector<2x96xf32> to vector<2x32xf32>
    %213 = arith.mulf %211, %169 : vector<2x32xf32>
    %214 = arith.mulf %210, %209 : vector<2x32xf32>
    %215 = arith.addf %213, %214 : vector<2x32xf32>
    %216 = math.tanh %215 : vector<2x32xf32>
    %217 = arith.mulf %212, %216 : vector<2x32xf32>
    %218 = arith.truncf %217 : vector<2x32xf32> to vector<2x32xbf16>
    %cst_46 = arith.constant dense<0.000000e+00> : vector<2x128xf32>
    %219 = tpu.matmul %218, %1, %cst_46 {dimension_numbers = #tpu.dot_dimension_numbers<[1], [0], [0], [1], [0, 0, 1, 1], [], []>} : vector<2x32xbf16>, vector<32x128xbf16>, vector<2x128xf32> -> vector<2x128xf32>
    %220 = arith.addf %219, %5 : vector<2x128xf32>
    %221 = arith.truncf %193 : vector<2x32xf32> to vector<2x32xbf16>
    %cst_47 = arith.constant dense<0.000000e+00> : vector<2x128xf32>
    %222 = tpu.matmul %221, %2, %cst_47 {dimension_numbers = #tpu.dot_dimension_numbers<[1], [0], [0], [1], [0, 0, 1, 1], [], []>} : vector<2x32xbf16>, vector<32x128xbf16>, vector<2x128xf32> -> vector<2x128xf32>
    %223 = arith.addf %220, %222 : vector<2x128xf32>
    %224 = vector.extract_strided_slice %223 {offsets = [0, 0], sizes = [2, 96], strides = [1, 1]} : vector<2x128xf32> to vector<2x96xf32>
    %225 = arith.negf %224 : vector<2x96xf32>
    %226 = math.exp %225 : vector<2x96xf32>
    %cst_48 = arith.constant 1.000000e+00 : f32
    %227 = vector.broadcast %cst_48 : f32 to vector<2x96xf32>
    %228 = arith.addf %227, %226 : vector<2x96xf32>
    %229 = arith.divf %227, %228 : vector<2x96xf32>
    %230 = vector.extract_strided_slice %223 {offsets = [0, 96], sizes = [2, 32], strides = [1, 1]} : vector<2x128xf32> to vector<2x32xf32>
    %231 = math.tanh %230 : vector<2x32xf32>
    %232 = vector.extract_strided_slice %229 {offsets = [0, 0], sizes = [2, 32], strides = [1, 1]} : vector<2x96xf32> to vector<2x32xf32>
    %233 = vector.extract_strided_slice %229 {offsets = [0, 32], sizes = [2, 32], strides = [1, 1]} : vector<2x96xf32> to vector<2x32xf32>
    %234 = vector.extract_strided_slice %229 {offsets = [0, 64], sizes = [2, 32], strides = [1, 1]} : vector<2x96xf32> to vector<2x32xf32>
    %235 = arith.mulf %233, %191 : vector<2x32xf32>
    %236 = arith.mulf %232, %231 : vector<2x32xf32>
    %237 = arith.addf %235, %236 : vector<2x32xf32>
    %238 = math.tanh %237 : vector<2x32xf32>
    %239 = arith.mulf %234, %238 : vector<2x32xf32>
    %240 = arith.truncf %239 : vector<2x32xf32> to vector<2x32xbf16>
    %c128 = arith.constant 128 : index
    %c0_49 = arith.constant 0 : index
    %241 = vector.load %arg7[%c128, %c0_49] : memref<256x4xbf16, #tpu.memory_space<vmem>>, vector<32x4xbf16>
    %cst_50 = arith.constant dense<0.000000e+00> : vector<2x4xf32>
    %242 = tpu.matmul %240, %241, %cst_50 {dimension_numbers = #tpu.dot_dimension_numbers<[1], [0], [0], [1], [0, 0, 1, 1], [], []>} : vector<2x32xbf16>, vector<32x4xbf16>, vector<2x4xf32> -> vector<2x4xf32>
    %243 = arith.addf %197, %242 : vector<2x4xf32>
    %244 = vector.extract_strided_slice %11 {offsets = [10, 0], sizes = [2, 128], strides = [1, 1]} : vector<16x128xf32> to vector<2x128xf32>
    %245 = arith.truncf %217 : vector<2x32xf32> to vector<2x32xbf16>
    %cst_51 = arith.constant dense<0.000000e+00> : vector<2x128xf32>
    %246 = tpu.matmul %245, %0, %cst_51 {dimension_numbers = #tpu.dot_dimension_numbers<[1], [0], [0], [1], [0, 0, 1, 1], [], []>} : vector<2x32xbf16>, vector<32x128xbf16>, vector<2x128xf32> -> vector<2x128xf32>
    %247 = arith.addf %244, %246 : vector<2x128xf32>
    %248 = vector.extract_strided_slice %247 {offsets = [0, 0], sizes = [2, 96], strides = [1, 1]} : vector<2x128xf32> to vector<2x96xf32>
    %249 = arith.negf %248 : vector<2x96xf32>
    %250 = math.exp %249 : vector<2x96xf32>
    %cst_52 = arith.constant 1.000000e+00 : f32
    %251 = vector.broadcast %cst_52 : f32 to vector<2x96xf32>
    %252 = arith.addf %251, %250 : vector<2x96xf32>
    %253 = arith.divf %251, %252 : vector<2x96xf32>
    %254 = vector.extract_strided_slice %247 {offsets = [0, 96], sizes = [2, 32], strides = [1, 1]} : vector<2x128xf32> to vector<2x32xf32>
    %255 = math.tanh %254 : vector<2x32xf32>
    %256 = vector.extract_strided_slice %253 {offsets = [0, 0], sizes = [2, 32], strides = [1, 1]} : vector<2x96xf32> to vector<2x32xf32>
    %257 = vector.extract_strided_slice %253 {offsets = [0, 32], sizes = [2, 32], strides = [1, 1]} : vector<2x96xf32> to vector<2x32xf32>
    %258 = vector.extract_strided_slice %253 {offsets = [0, 64], sizes = [2, 32], strides = [1, 1]} : vector<2x96xf32> to vector<2x32xf32>
    %259 = arith.mulf %257, %215 : vector<2x32xf32>
    %260 = arith.mulf %256, %255 : vector<2x32xf32>
    %261 = arith.addf %259, %260 : vector<2x32xf32>
    %262 = math.tanh %261 : vector<2x32xf32>
    %263 = arith.mulf %258, %262 : vector<2x32xf32>
    %264 = arith.truncf %263 : vector<2x32xf32> to vector<2x32xbf16>
    %cst_53 = arith.constant dense<0.000000e+00> : vector<2x128xf32>
    %265 = tpu.matmul %264, %1, %cst_53 {dimension_numbers = #tpu.dot_dimension_numbers<[1], [0], [0], [1], [0, 0, 1, 1], [], []>} : vector<2x32xbf16>, vector<32x128xbf16>, vector<2x128xf32> -> vector<2x128xf32>
    %266 = arith.addf %265, %5 : vector<2x128xf32>
    %267 = arith.truncf %239 : vector<2x32xf32> to vector<2x32xbf16>
    %cst_54 = arith.constant dense<0.000000e+00> : vector<2x128xf32>
    %268 = tpu.matmul %267, %2, %cst_54 {dimension_numbers = #tpu.dot_dimension_numbers<[1], [0], [0], [1], [0, 0, 1, 1], [], []>} : vector<2x32xbf16>, vector<32x128xbf16>, vector<2x128xf32> -> vector<2x128xf32>
    %269 = arith.addf %266, %268 : vector<2x128xf32>
    %270 = vector.extract_strided_slice %269 {offsets = [0, 0], sizes = [2, 96], strides = [1, 1]} : vector<2x128xf32> to vector<2x96xf32>
    %271 = arith.negf %270 : vector<2x96xf32>
    %272 = math.exp %271 : vector<2x96xf32>
    %cst_55 = arith.constant 1.000000e+00 : f32
    %273 = vector.broadcast %cst_55 : f32 to vector<2x96xf32>
    %274 = arith.addf %273, %272 : vector<2x96xf32>
    %275 = arith.divf %273, %274 : vector<2x96xf32>
    %276 = vector.extract_strided_slice %269 {offsets = [0, 96], sizes = [2, 32], strides = [1, 1]} : vector<2x128xf32> to vector<2x32xf32>
    %277 = math.tanh %276 : vector<2x32xf32>
    %278 = vector.extract_strided_slice %275 {offsets = [0, 0], sizes = [2, 32], strides = [1, 1]} : vector<2x96xf32> to vector<2x32xf32>
    %279 = vector.extract_strided_slice %275 {offsets = [0, 32], sizes = [2, 32], strides = [1, 1]} : vector<2x96xf32> to vector<2x32xf32>
    %280 = vector.extract_strided_slice %275 {offsets = [0, 64], sizes = [2, 32], strides = [1, 1]} : vector<2x96xf32> to vector<2x32xf32>
    %281 = arith.mulf %279, %237 : vector<2x32xf32>
    %282 = arith.mulf %278, %277 : vector<2x32xf32>
    %283 = arith.addf %281, %282 : vector<2x32xf32>
    %284 = math.tanh %283 : vector<2x32xf32>
    %285 = arith.mulf %280, %284 : vector<2x32xf32>
    %286 = arith.truncf %285 : vector<2x32xf32> to vector<2x32xbf16>
    %c160 = arith.constant 160 : index
    %c0_56 = arith.constant 0 : index
    %287 = vector.load %arg7[%c160, %c0_56] : memref<256x4xbf16, #tpu.memory_space<vmem>>, vector<32x4xbf16>
    %cst_57 = arith.constant dense<0.000000e+00> : vector<2x4xf32>
    %288 = tpu.matmul %286, %287, %cst_57 {dimension_numbers = #tpu.dot_dimension_numbers<[1], [0], [0], [1], [0, 0, 1, 1], [], []>} : vector<2x32xbf16>, vector<32x4xbf16>, vector<2x4xf32> -> vector<2x4xf32>
    %289 = arith.addf %243, %288 : vector<2x4xf32>
    %290 = vector.extract_strided_slice %11 {offsets = [12, 0], sizes = [2, 128], strides = [1, 1]} : vector<16x128xf32> to vector<2x128xf32>
    %291 = arith.truncf %263 : vector<2x32xf32> to vector<2x32xbf16>
    %cst_58 = arith.constant dense<0.000000e+00> : vector<2x128xf32>
    %292 = tpu.matmul %291, %0, %cst_58 {dimension_numbers = #tpu.dot_dimension_numbers<[1], [0], [0], [1], [0, 0, 1, 1], [], []>} : vector<2x32xbf16>, vector<32x128xbf16>, vector<2x128xf32> -> vector<2x128xf32>
    %293 = arith.addf %290, %292 : vector<2x128xf32>
    %294 = vector.extract_strided_slice %293 {offsets = [0, 0], sizes = [2, 96], strides = [1, 1]} : vector<2x128xf32> to vector<2x96xf32>
    %295 = arith.negf %294 : vector<2x96xf32>
    %296 = math.exp %295 : vector<2x96xf32>
    %cst_59 = arith.constant 1.000000e+00 : f32
    %297 = vector.broadcast %cst_59 : f32 to vector<2x96xf32>
    %298 = arith.addf %297, %296 : vector<2x96xf32>
    %299 = arith.divf %297, %298 : vector<2x96xf32>
    %300 = vector.extract_strided_slice %293 {offsets = [0, 96], sizes = [2, 32], strides = [1, 1]} : vector<2x128xf32> to vector<2x32xf32>
    %301 = math.tanh %300 : vector<2x32xf32>
    %302 = vector.extract_strided_slice %299 {offsets = [0, 0], sizes = [2, 32], strides = [1, 1]} : vector<2x96xf32> to vector<2x32xf32>
    %303 = vector.extract_strided_slice %299 {offsets = [0, 32], sizes = [2, 32], strides = [1, 1]} : vector<2x96xf32> to vector<2x32xf32>
    %304 = vector.extract_strided_slice %299 {offsets = [0, 64], sizes = [2, 32], strides = [1, 1]} : vector<2x96xf32> to vector<2x32xf32>
    %305 = arith.mulf %303, %261 : vector<2x32xf32>
    %306 = arith.mulf %302, %301 : vector<2x32xf32>
    %307 = arith.addf %305, %306 : vector<2x32xf32>
    %308 = math.tanh %307 : vector<2x32xf32>
    %309 = arith.mulf %304, %308 : vector<2x32xf32>
    %310 = arith.truncf %309 : vector<2x32xf32> to vector<2x32xbf16>
    %cst_60 = arith.constant dense<0.000000e+00> : vector<2x128xf32>
    %311 = tpu.matmul %310, %1, %cst_60 {dimension_numbers = #tpu.dot_dimension_numbers<[1], [0], [0], [1], [0, 0, 1, 1], [], []>} : vector<2x32xbf16>, vector<32x128xbf16>, vector<2x128xf32> -> vector<2x128xf32>
    %312 = arith.addf %311, %5 : vector<2x128xf32>
    %313 = arith.truncf %285 : vector<2x32xf32> to vector<2x32xbf16>
    %cst_61 = arith.constant dense<0.000000e+00> : vector<2x128xf32>
    %314 = tpu.matmul %313, %2, %cst_61 {dimension_numbers = #tpu.dot_dimension_numbers<[1], [0], [0], [1], [0, 0, 1, 1], [], []>} : vector<2x32xbf16>, vector<32x128xbf16>, vector<2x128xf32> -> vector<2x128xf32>
    %315 = arith.addf %312, %314 : vector<2x128xf32>
    %316 = vector.extract_strided_slice %315 {offsets = [0, 0], sizes = [2, 96], strides = [1, 1]} : vector<2x128xf32> to vector<2x96xf32>
    %317 = arith.negf %316 : vector<2x96xf32>
    %318 = math.exp %317 : vector<2x96xf32>
    %cst_62 = arith.constant 1.000000e+00 : f32
    %319 = vector.broadcast %cst_62 : f32 to vector<2x96xf32>
    %320 = arith.addf %319, %318 : vector<2x96xf32>
    %321 = arith.divf %319, %320 : vector<2x96xf32>
    %322 = vector.extract_strided_slice %315 {offsets = [0, 96], sizes = [2, 32], strides = [1, 1]} : vector<2x128xf32> to vector<2x32xf32>
    %323 = math.tanh %322 : vector<2x32xf32>
    %324 = vector.extract_strided_slice %321 {offsets = [0, 0], sizes = [2, 32], strides = [1, 1]} : vector<2x96xf32> to vector<2x32xf32>
    %325 = vector.extract_strided_slice %321 {offsets = [0, 32], sizes = [2, 32], strides = [1, 1]} : vector<2x96xf32> to vector<2x32xf32>
    %326 = vector.extract_strided_slice %321 {offsets = [0, 64], sizes = [2, 32], strides = [1, 1]} : vector<2x96xf32> to vector<2x32xf32>
    %327 = arith.mulf %325, %283 : vector<2x32xf32>
    %328 = arith.mulf %324, %323 : vector<2x32xf32>
    %329 = arith.addf %327, %328 : vector<2x32xf32>
    %330 = math.tanh %329 : vector<2x32xf32>
    %331 = arith.mulf %326, %330 : vector<2x32xf32>
    %332 = arith.truncf %331 : vector<2x32xf32> to vector<2x32xbf16>
    %c192 = arith.constant 192 : index
    %c0_63 = arith.constant 0 : index
    %333 = vector.load %arg7[%c192, %c0_63] : memref<256x4xbf16, #tpu.memory_space<vmem>>, vector<32x4xbf16>
    %cst_64 = arith.constant dense<0.000000e+00> : vector<2x4xf32>
    %334 = tpu.matmul %332, %333, %cst_64 {dimension_numbers = #tpu.dot_dimension_numbers<[1], [0], [0], [1], [0, 0, 1, 1], [], []>} : vector<2x32xbf16>, vector<32x4xbf16>, vector<2x4xf32> -> vector<2x4xf32>
    %335 = arith.addf %289, %334 : vector<2x4xf32>
    %336 = vector.extract_strided_slice %11 {offsets = [14, 0], sizes = [2, 128], strides = [1, 1]} : vector<16x128xf32> to vector<2x128xf32>
    %337 = arith.truncf %309 : vector<2x32xf32> to vector<2x32xbf16>
    %cst_65 = arith.constant dense<0.000000e+00> : vector<2x128xf32>
    %338 = tpu.matmul %337, %0, %cst_65 {dimension_numbers = #tpu.dot_dimension_numbers<[1], [0], [0], [1], [0, 0, 1, 1], [], []>} : vector<2x32xbf16>, vector<32x128xbf16>, vector<2x128xf32> -> vector<2x128xf32>
    %339 = arith.addf %336, %338 : vector<2x128xf32>
    %340 = vector.extract_strided_slice %339 {offsets = [0, 0], sizes = [2, 96], strides = [1, 1]} : vector<2x128xf32> to vector<2x96xf32>
    %341 = arith.negf %340 : vector<2x96xf32>
    %342 = math.exp %341 : vector<2x96xf32>
    %cst_66 = arith.constant 1.000000e+00 : f32
    %343 = vector.broadcast %cst_66 : f32 to vector<2x96xf32>
    %344 = arith.addf %343, %342 : vector<2x96xf32>
    %345 = arith.divf %343, %344 : vector<2x96xf32>
    %346 = vector.extract_strided_slice %339 {offsets = [0, 96], sizes = [2, 32], strides = [1, 1]} : vector<2x128xf32> to vector<2x32xf32>
    %347 = math.tanh %346 : vector<2x32xf32>
    %348 = vector.extract_strided_slice %345 {offsets = [0, 0], sizes = [2, 32], strides = [1, 1]} : vector<2x96xf32> to vector<2x32xf32>
    %349 = vector.extract_strided_slice %345 {offsets = [0, 32], sizes = [2, 32], strides = [1, 1]} : vector<2x96xf32> to vector<2x32xf32>
    %350 = vector.extract_strided_slice %345 {offsets = [0, 64], sizes = [2, 32], strides = [1, 1]} : vector<2x96xf32> to vector<2x32xf32>
    %351 = arith.mulf %349, %307 : vector<2x32xf32>
    %352 = arith.mulf %348, %347 : vector<2x32xf32>
    %353 = arith.addf %351, %352 : vector<2x32xf32>
    %354 = math.tanh %353 : vector<2x32xf32>
    %355 = arith.mulf %350, %354 : vector<2x32xf32>
    %356 = arith.truncf %355 : vector<2x32xf32> to vector<2x32xbf16>
    %cst_67 = arith.constant dense<0.000000e+00> : vector<2x128xf32>
    %357 = tpu.matmul %356, %1, %cst_67 {dimension_numbers = #tpu.dot_dimension_numbers<[1], [0], [0], [1], [0, 0, 1, 1], [], []>} : vector<2x32xbf16>, vector<32x128xbf16>, vector<2x128xf32> -> vector<2x128xf32>
    %358 = arith.addf %357, %5 : vector<2x128xf32>
    %359 = arith.truncf %331 : vector<2x32xf32> to vector<2x32xbf16>
    %cst_68 = arith.constant dense<0.000000e+00> : vector<2x128xf32>
    %360 = tpu.matmul %359, %2, %cst_68 {dimension_numbers = #tpu.dot_dimension_numbers<[1], [0], [0], [1], [0, 0, 1, 1], [], []>} : vector<2x32xbf16>, vector<32x128xbf16>, vector<2x128xf32> -> vector<2x128xf32>
    %361 = arith.addf %358, %360 : vector<2x128xf32>
    %362 = vector.extract_strided_slice %361 {offsets = [0, 0], sizes = [2, 96], strides = [1, 1]} : vector<2x128xf32> to vector<2x96xf32>
    %363 = arith.negf %362 : vector<2x96xf32>
    %364 = math.exp %363 : vector<2x96xf32>
    %cst_69 = arith.constant 1.000000e+00 : f32
    %365 = vector.broadcast %cst_69 : f32 to vector<2x96xf32>
    %366 = arith.addf %365, %364 : vector<2x96xf32>
    %367 = arith.divf %365, %366 : vector<2x96xf32>
    %368 = vector.extract_strided_slice %361 {offsets = [0, 96], sizes = [2, 32], strides = [1, 1]} : vector<2x128xf32> to vector<2x32xf32>
    %369 = math.tanh %368 : vector<2x32xf32>
    %370 = vector.extract_strided_slice %367 {offsets = [0, 0], sizes = [2, 32], strides = [1, 1]} : vector<2x96xf32> to vector<2x32xf32>
    %371 = vector.extract_strided_slice %367 {offsets = [0, 32], sizes = [2, 32], strides = [1, 1]} : vector<2x96xf32> to vector<2x32xf32>
    %372 = vector.extract_strided_slice %367 {offsets = [0, 64], sizes = [2, 32], strides = [1, 1]} : vector<2x96xf32> to vector<2x32xf32>
    %373 = arith.mulf %371, %329 : vector<2x32xf32>
    %374 = arith.mulf %370, %369 : vector<2x32xf32>
    %375 = arith.addf %373, %374 : vector<2x32xf32>
    %376 = math.tanh %375 : vector<2x32xf32>
    %377 = arith.mulf %372, %376 : vector<2x32xf32>
    %378 = arith.truncf %377 : vector<2x32xf32> to vector<2x32xbf16>
    %c224 = arith.constant 224 : index
    %c0_70 = arith.constant 0 : index
    %379 = vector.load %arg7[%c224, %c0_70] : memref<256x4xbf16, #tpu.memory_space<vmem>>, vector<32x4xbf16>
    %cst_71 = arith.constant dense<0.000000e+00> : vector<2x4xf32>
    %380 = tpu.matmul %378, %379, %cst_71 {dimension_numbers = #tpu.dot_dimension_numbers<[1], [0], [0], [1], [0, 0, 1, 1], [], []>} : vector<2x32xbf16>, vector<32x4xbf16>, vector<2x4xf32> -> vector<2x4xf32>
    %381 = arith.addf %335, %380 : vector<2x4xf32>
    %c0_72 = arith.constant 0 : index
    %c0_73 = arith.constant 0 : index
    %382 = vector.load %arg8[%c0_72, %c0_73] : memref<1x4xf32, #tpu.memory_space<vmem>>, vector<1x4xf32>
    %383 = vector.broadcast %382 : vector<1x4xf32> to vector<2x4xf32>
    %384 = arith.addf %381, %383 : vector<2x4xf32>
    %c0_74 = arith.constant 0 : index
    %c0_75 = arith.constant 0 : index
    %385 = vector.load %arg9[%c0_74, %c0_75] : memref<2x4xf32, #tpu.memory_space<vmem>>, vector<2x4xf32>
    tpu.vector_store %arg9[%c0_74, %c0_75], %384 {strides = array<i32>} : memref<2x4xf32, #tpu.memory_space<vmem>>, vector<2x4xf32>,
    return
  }
}

</mosaic_0001>

<llo_original>
// kernel: tpu_custom_call.1
$region0: #{tpu_custom_call.1}
  #allocation0 [shape = 'u32[]', space=smem, size = 0x4, offset = 0x4, fixed_abs, tag = 'smem constant byte address 0x4 - core index']
  #allocation1 [shape = 'u32[144,128]{1,0:T(1,128)}', space=vmem, size = 0x12000, scoped, tag = 'internal scratch']
  %s0 = inlined_call_operand.vmem [shape: bf16[16,8], index: 0, kind: input, shape index: {}]
  %s1 = inlined_call_operand.vmem [shape: bf16[8,128], index: 1, kind: input, shape index: {}]
  %s2 = inlined_call_operand.vmem [shape: bf16[32,128], index: 2, kind: input, shape index: {}]
  %s3 = inlined_call_operand.vmem [shape: f32[1,128], index: 3, kind: input, shape index: {}]
  %s4 = inlined_call_operand.vmem [shape: bf16[32,128], index: 4, kind: input, shape index: {}]
  %s5 = inlined_call_operand.vmem [shape: bf16[32,128], index: 5, kind: input, shape index: {}]
  %s6 = inlined_call_operand.vmem [shape: f32[1,128], index: 6, kind: input, shape index: {}]
  %s7 = inlined_call_operand.vmem [shape: bf16[256,4], index: 7, kind: input, shape index: {}]
  %s8 = inlined_call_operand.vmem [shape: f32[1,4], index: 8, kind: input, shape index: {}]
  %s9 = inlined_call_operand.hbm [shape: f32[2,4], index: 9, kind: output, shape index: {}]
  %s10 = sld [smem:[#allocation0]]
  $region46: #{tpu_custom_call.1} parent=0
    _
  %s12 = ssub.s32 1, %s10
  %s13 = scalar_select 0, %s12, %s10
  $region1: #{tpu_custom_call.1} parent=0
    #allocation2 [shape = 'u8[1024]{0}', space=vmem, size = 0x400, scoped, tag = 'output window, operand 0, single buffered']
    #allocation3 [shape = 's32[1]{0}', space=sflag, size = 0x4, scoped, tag = 'scoped memory for tpu_custom_call.1']
    %14 = vsyncpa [#allocation3], 0
    // Predicated region
    $region2: #{tpu_custom_call.1} parent=1 // pred_check
      _
    $region3: #{tpu_custom_call.1} parent=1 // pred_check_branch
      %16 = sbr.rel (0) target = $region5
    $region4: #{tpu_custom_call.1} parent=1 // pred_region
      _
    $region5: #{tpu_custom_call.1} parent=1 // pred_fallthru
      _
    // Predicated region
    $region6: #{tpu_custom_call.1} parent=1 // pred_check
      _
    $region7: #{tpu_custom_call.1} parent=1 // pred_check_branch
      %18 = sbr.rel (0) target = $region9
    $region8: #{tpu_custom_call.1} parent=1 // pred_region
      _
    $region9: #{tpu_custom_call.1} parent=1 // pred_fallthru
      _
    // Predicated region
    $region10: #{tpu_custom_call.1} parent=1 // pred_check
      _
    $region11: #{tpu_custom_call.1} parent=1 // pred_check_branch
      %20 = sbr.rel (0) target = $region13
    $region12: #{tpu_custom_call.1} parent=1 // pred_region
      _
    $region13: #{tpu_custom_call.1} parent=1 // pred_fallthru
      _
    // Predicated region
    $region14: #{tpu_custom_call.1} parent=1 // pred_check
      _
    $region15: #{tpu_custom_call.1} parent=1 // pred_check_branch
      %22 = sbr.rel (0) target = $region17
    $region16: #{tpu_custom_call.1} parent=1 // pred_region
      _
    $region17: #{tpu_custom_call.1} parent=1 // pred_fallthru
      _
    // Predicated region
    $region18: #{tpu_custom_call.1} parent=1 // pred_check
      _
    $region19: #{tpu_custom_call.1} parent=1 // pred_check_branch
      %24 = sbr.rel (0) target = $region21
    $region20: #{tpu_custom_call.1} parent=1 // pred_region
      _
    $region21: #{tpu_custom_call.1} parent=1 // pred_fallthru
      _
    // Predicated region
    $region22: #{tpu_custom_call.1} parent=1 // pred_check
      _
    $region23: #{tpu_custom_call.1} parent=1 // pred_check_branch
      %26 = sbr.rel (0) target = $region25
    $region24: #{tpu_custom_call.1} parent=1 // pred_region
      _
    $region25: #{tpu_custom_call.1} parent=1 // pred_fallthru
      _
    // Predicated region
    $region26: #{tpu_custom_call.1} parent=1 // pred_check
      _
    $region27: #{tpu_custom_call.1} parent=1 // pred_check_branch
      %28 = sbr.rel (0) target = $region29
    $region28: #{tpu_custom_call.1} parent=1 // pred_region
      _
    $region29: #{tpu_custom_call.1} parent=1 // pred_fallthru
      _
    // Predicated region
    $region30: #{tpu_custom_call.1} parent=1 // pred_check
      _
    $region31: #{tpu_custom_call.1} parent=1 // pred_check_branch
      %30 = sbr.rel (0) target = $region33
    $region32: #{tpu_custom_call.1} parent=1 // pred_region
      _
    $region33: #{tpu_custom_call.1} parent=1 // pred_fallthru
      _
    // Predicated region
    $region34: #{tpu_custom_call.1} parent=1 // pred_check
      _
    $region35: #{tpu_custom_call.1} parent=1 // pred_check_branch
      %32 = sbr.rel (0) target = $region37
    $region36: #{tpu_custom_call.1} parent=1 // pred_region
      _
    $region37: #{tpu_custom_call.1} parent=1 // pred_fallthru
      _
    %v34 = vld [vmem:[%s2] sm:$0xf]
    %v35 = vld [vmem:[%s2 + $0x4] sm:$0xf]
    %v36 = vld [vmem:[%s2 + $0x8] sm:$0xf]
    %v37 = vld [vmem:[%s2 + $0xc] sm:$0xf]
    %v38 = vld [vmem:[%s4] sm:$0xf]
    %v39 = vld [vmem:[%s4 + $0x4] sm:$0xf]
    %v40 = vld [vmem:[%s4 + $0x8] sm:$0xf]
    %v41 = vld [vmem:[%s4 + $0xc] sm:$0xf]
    %v42 = vld [vmem:[%s5] sm:$0xf]
    %v43 = vld [vmem:[%s5 + $0x4] sm:$0xf]
    %v44 = vld [vmem:[%s5 + $0x8] sm:$0xf]
    %v45 = vld [vmem:[%s5 + $0xc] sm:$0xf]
    %v46 = vld [vmem:[%s6] sm:$0x1]
    %v48 = vlaneseq
    %v49 = vshrl.u32 %v48, 7
    %v50 = vsub.s32 0, %v49
    %v51 = vrot.slane %v46, %v50
    %v53 = vld [vmem:[%s0] sm:$0xf]
    %v54 = vld [vmem:[%s0 + $0x4] sm:$0xf]
    %v55 = vld [vmem:[%s1] sm:$0xf]
    %v56 = vld [vmem:[%s3] sm:$0x1]
    %v58 = vlaneseq
    %v59 = vshrl.u32 %v58, 7
    %v60 = vsub.s32 0, %v59
    %v61 = vrot.slane %v56, %v60
    %v65 = vunpack.c.l.b16 %v53
    %v66 = vunpack.c.l.b16 %v54
    %v67 = vpack.c.b16 %v66, %v65
    %vm68 = vcmask 64512
    %v70 = vsel %vm68, %v67, 0
    %vm72 = vcmask 1043456
    %v74 = vsel %vm72, %v55, 0
    %76 = vmatprep.subr.bf16.mxu0 0
    %77 = vmatpush1.bf16.msra.mxu0 0
    %78 = vmatprep.subr.bf16.mxu0 0
    %79 = vmatpush1.bf16.msra.mxu0 0
    %80 = vmatprep.subr.bf16.mxu0 0
    %81 = vmatpush1.bf16.msra.mxu0 0
    %82 = vmatprep.subr.bf16.mxu0 0
    %83 = vmatpush1.bf16.msra.mxu0 0
    %84 = vmatprep.subr.bf16.mxu0 0
    %85 = vmatpush1.bf16.msra.mxu0 0
    %86 = vmatprep.subr.bf16.mxu0 0
    %87 = vmatpush1.bf16.msra.mxu0 0
    %88 = vmatprep.subr.bf16.mxu0 0
    %89 = vmatpush1.bf16.msra.mxu0 0
    %90 = vmatprep.subr.bf16.mxu0 0
    %91 = vmatpush1.bf16.msra.mxu0 %v74
    %92 = vmatprep.subr.bf16.mxu0 0
    %93 = vmatpush2.bf16.msra.mxu0 0
    %94 = vmatprep.subr.bf16.mxu0 0
    %95 = vmatpush2.bf16.msra.mxu0 0
    %96 = vmatprep.subr.bf16.mxu0 0
    %97 = vmatpush2.bf16.msra.mxu0 0
    %98 = vmatprep.subr.bf16.mxu0 0
    %99 = vmatpush2.bf16.msra.mxu0 0
    %100 = vmatprep.subr.bf16.mxu0 0
    %101 = vmatpush2.bf16.msra.mxu0 0
    %102 = vmatprep.subr.bf16.mxu0 0
    %103 = vmatpush2.bf16.msra.mxu0 0
    %104 = vmatprep.subr.bf16.mxu0 0
    %105 = vmatpush2.bf16.msra.mxu0 0
    %106 = vmatprep.subr.bf16.mxu0 0
    %107 = vmatpush2.bf16.msra.mxu0 0
    %108 = vmatprep.mubr.bf16.mxu0 0
    %109 = vmatmul.mubr.bf16.gmra.mxu0 %v70
    %v110 = vpop.f32.mrf.mxu0
    %v111 = vadd.f32 %v61, %v110
    %v112 = vpop.f32.mrf.mxu0
    %v113 = vpop.f32.mrf.mxu0
    %v114 = vadd.f32 %v61, %v113
    %v115 = vpop.f32.mrf.mxu0
    %116 = vdwg.mxu0
    %v121 = vunpack.c.l.b16 %v34
    %v122 = vunpack.c.l.b16 %v35
    %v123 = vunpack.c.l.b16 %v36
    %v124 = vunpack.c.l.b16 %v37
    %v125 = vpack.c.b16 %v122, %v121
    %v126 = vpack.c.b16 %v124, %v123
    %vm129 = vcmask 261120
    %v131 = vsel %vm129, 0, 0
    %133 = vmatprep.subr.bf16.mxu0 0
    %134 = vmatpush1.bf16.msra.mxu0 0
    %135 = vmatprep.subr.bf16.mxu0 0
    %136 = vmatpush1.bf16.msra.mxu0 0
    %137 = vmatprep.subr.bf16.mxu0 0
    %138 = vmatpush1.bf16.msra.mxu0 0
    %139 = vmatprep.subr.bf16.mxu0 0
    %140 = vmatpush1.bf16.msra.mxu0 0
    %141 = vmatprep.subr.bf16.mxu0 0
    %142 = vmatpush1.bf16.msra.mxu0 0
    %143 = vmatprep.subr.bf16.mxu0 0
    %144 = vmatpush1.bf16.msra.mxu0 0
    %145 = vmatprep.subr.bf16.mxu0 0
    %146 = vmatpush1.bf16.msra.mxu0 %v126
    %147 = vmatprep.subr.bf16.mxu0 0
    %148 = vmatpush1.bf16.msra.mxu0 %v125
    %149 = vmatprep.subr.bf16.mxu0 0
    %150 = vmatpush2.bf16.msra.mxu0 0
    %151 = vmatprep.subr.bf16.mxu0 0
    %152 = vmatpush2.bf16.msra.mxu0 0
    %153 = vmatprep.subr.bf16.mxu0 0
    %154 = vmatpush2.bf16.msra.mxu0 0
    %155 = vmatprep.subr.bf16.mxu0 0
    %156 = vmatpush2.bf16.msra.mxu0 0
    %157 = vmatprep.subr.bf16.mxu0 0
    %158 = vmatpush2.bf16.msra.mxu0 0
    %159 = vmatprep.subr.bf16.mxu0 0
    %160 = vmatpush2.bf16.msra.mxu0 0
    %161 = vmatprep.subr.bf16.mxu0 0
    %162 = vmatpush2.bf16.msra.mxu0 0
    %163 = vmatprep.subr.bf16.mxu0 0
    %164 = vmatpush2.bf16.msra.mxu0 0
    %165 = vmatprep.mubr.bf16.mxu0 0
    %166 = vmatmul.mubr.bf16.gmra.mxu0 %v131
    %v167 = vpop.f32.mrf.mxu0
    %v168 = vadd.f32 0.0, %v167
    %v169 = vpop.f32.mrf.mxu0
    %v170 = vpop.f32.mrf.mxu0
    %v171 = vpop.f32.mrf.mxu0
    %172 = vdwg.mxu0
    %v173 = vadd.f32 %v111, %v168
    %v174 = vxor.u32 %v173, 2147483648
    %v175 = vmul.f32 %v174, 1.442695
    %v176 = vpow.pop %v175
    %v177 = vadd.f32 %v176, 1.0
    %v178 = vrcp.pop %v177
    %v179 = vmul.f32 1.0, %v178
    %v180 = vtanh.pop %v173
    %v181 = vmul.f32 %v179, 0.0
    %183 = vrot.lane.b32.xlu0 %v180, 32
    %v184 = vpop.permute.xlu0 %183
    %v186 = vmul.f32 %v179, %v184
    %188 = vrot.lane.b32.xlu0 %v186, 32
    %v189 = vpop.permute.xlu0 %188
    %v191 = vadd.f32 %v181, %v189
    %v192 = vtanh.pop %v191
    %194 = vrot.lane.b32.xlu0 %v192, 32
    %v195 = vpop.permute.xlu0 %194
    %v197 = vmul.f32 %v179, %v195
    %v198 = vpack.c.bf16 %v197, %v197
    %200 = vrot.lane.b32.xlu0 %v198, 64
    %v201 = vpop.permute.xlu0 %200
    %v206 = vunpack.c.l.b16 %v38
    %v207 = vunpack.c.l.b16 %v39
    %v208 = vunpack.c.l.b16 %v40
    %v209 = vunpack.c.l.b16 %v41
    %v210 = vpack.c.b16 %v207, %v206
    %v211 = vpack.c.b16 %v209, %v208
    %v215 = vsel %vm129, %v201, 0
    %217 = vmatprep.subr.bf16.mxu0 0
    %218 = vmatpush1.bf16.msra.mxu0 0
    %219 = vmatprep.subr.bf16.mxu0 0
    %220 = vmatpush1.bf16.msra.mxu0 0
    %221 = vmatprep.subr.bf16.mxu0 0
    %222 = vmatpush1.bf16.msra.mxu0 0
    %223 = vmatprep.subr.bf16.mxu0 0
    %224 = vmatpush1.bf16.msra.mxu0 0
    %225 = vmatprep.subr.bf16.mxu0 0
    %226 = vmatpush1.bf16.msra.mxu0 0
    %227 = vmatprep.subr.bf16.mxu0 0
    %228 = vmatpush1.bf16.msra.mxu0 0
    %229 = vmatprep.subr.bf16.mxu0 0
    %230 = vmatpush1.bf16.msra.mxu0 %v211
    %231 = vmatprep.subr.bf16.mxu0 0
    %232 = vmatpush1.bf16.msra.mxu0 %v210
    %233 = vmatprep.subr.bf16.mxu0 0
    %234 = vmatpush2.bf16.msra.mxu0 0
    %235 = vmatprep.subr.bf16.mxu0 0
    %236 = vmatpush2.bf16.msra.mxu0 0
    %237 = vmatprep.subr.bf16.mxu0 0
    %238 = vmatpush2.bf16.msra.mxu0 0
    %239 = vmatprep.subr.bf16.mxu0 0
    %240 = vmatpush2.bf16.msra.mxu0 0
    %241 = vmatprep.subr.bf16.mxu0 0
    %242 = vmatpush2.bf16.msra.mxu0 0
    %243 = vmatprep.subr.bf16.mxu0 0
    %244 = vmatpush2.bf16.msra.mxu0 0
    %245 = vmatprep.subr.bf16.mxu0 0
    %246 = vmatpush2.bf16.msra.mxu0 0
    %247 = vmatprep.subr.bf16.mxu0 0
    %248 = vmatpush2.bf16.msra.mxu0 0
    %249 = vmatprep.mubr.bf16.mxu0 0
    %250 = vmatmul.mubr.bf16.gmra.mxu0 %v215
    %v251 = vpop.f32.mrf.mxu0
    %v252 = vadd.f32 %v51, %v251
    %v253 = vpop.f32.mrf.mxu0
    %v254 = vpop.f32.mrf.mxu0
    %v255 = vpop.f32.mrf.mxu0
    %256 = vdwg.mxu0
    %v261 = vunpack.c.l.b16 %v42
    %v262 = vunpack.c.l.b16 %v43
    %v263 = vunpack.c.l.b16 %v44
    %v264 = vunpack.c.l.b16 %v45
    %v265 = vpack.c.b16 %v262, %v261
    %v266 = vpack.c.b16 %v264, %v263
    %269 = vmatprep.subr.bf16.mxu0 0
    %270 = vmatpush1.bf16.msra.mxu0 0
    %271 = vmatprep.subr.bf16.mxu0 0
    %272 = vmatpush1.bf16.msra.mxu0 0
    %273 = vmatprep.subr.bf16.mxu0 0
    %274 = vmatpush1.bf16.msra.mxu0 0
    %275 = vmatprep.subr.bf16.mxu0 0
    %276 = vmatpush1.bf16.msra.mxu0 0
    %277 = vmatprep.subr.bf16.mxu0 0
    %278 = vmatpush1.bf16.msra.mxu0 0
    %279 = vmatprep.subr.bf16.mxu0 0
    %280 = vmatpush1.bf16.msra.mxu0 0
    %281 = vmatprep.subr.bf16.mxu0 0
    %282 = vmatpush1.bf16.msra.mxu0 %v266
    %283 = vmatprep.subr.bf16.mxu0 0
    %284 = vmatpush1.bf16.msra.mxu0 %v265
    %285 = vmatprep.subr.bf16.mxu0 0
    %286 = vmatpush2.bf16.msra.mxu0 0
    %287 = vmatprep.subr.bf16.mxu0 0
    %288 = vmatpush2.bf16.msra.mxu0 0
    %289 = vmatprep.subr.bf16.mxu0 0
    %290 = vmatpush2.bf16.msra.mxu0 0
    %291 = vmatprep.subr.bf16.mxu0 0
    %292 = vmatpush2.bf16.msra.mxu0 0
    %293 = vmatprep.subr.bf16.mxu0 0
    %294 = vmatpush2.bf16.msra.mxu0 0
    %295 = vmatprep.subr.bf16.mxu0 0
    %296 = vmatpush2.bf16.msra.mxu0 0
    %297 = vmatprep.subr.bf16.mxu0 0
    %298 = vmatpush2.bf16.msra.mxu0 0
    %299 = vmatprep.subr.bf16.mxu0 0
    %300 = vmatpush2.bf16.msra.mxu0 0
    %301 = vmatprep.mubr.bf16.mxu0 0
    %302 = vmatmul.mubr.bf16.gmra.mxu0 %v131
    %v303 = vpop.f32.mrf.mxu0
    %v304 = vadd.f32 0.0, %v303
    %v305 = vpop.f32.mrf.mxu0
    %v306 = vpop.f32.mrf.mxu0
    %v307 = vpop.f32.mrf.mxu0
    %308 = vdwg.mxu0
    %v309 = vadd.f32 %v252, %v304
    %v310 = vxor.u32 %v309, 2147483648
    %v311 = vmul.f32 %v310, 1.442695
    %v312 = vpow.pop %v311
    %v313 = vadd.f32 %v312, 1.0
    %v314 = vrcp.pop %v313
    %v315 = vmul.f32 1.0, %v314
    %v316 = vtanh.pop %v309
    %v317 = vmul.f32 %v315, 0.0
    %319 = vrot.lane.b32.xlu0 %v316, 32
    %v320 = vpop.permute.xlu0 %319
    %v322 = vmul.f32 %v315, %v320
    %324 = vrot.lane.b32.xlu0 %v322, 32
    %v325 = vpop.permute.xlu0 %324
    %v327 = vadd.f32 %v317, %v325
    %v328 = vtanh.pop %v327
    %330 = vrot.lane.b32.xlu0 %v328, 32
    %v331 = vpop.permute.xlu0 %330
    %v333 = vmul.f32 %v315, %v331
    %v334 = vpack.c.bf16 %v333, %v333
    %v335 = vld [vmem:[%s7] sm:$0xf]
    %v336 = vld [vmem:[%s7 + $0x4] sm:$0xf]
    %v337 = vld [vmem:[%s7 + $0x8] sm:$0xf]
    %v338 = vld [vmem:[%s7 + $0xc] sm:$0xf]
    %339 = vmatprep.subr.bf16.mxu0 0
    %340 = vmatpush1.bf16.msra.mxu0 0
    %341 = vmatprep.subr.bf16.mxu0 0
    %342 = vmatpush1.bf16.msra.mxu0 0
    %343 = vmatprep.subr.bf16.mxu0 0
    %344 = vmatpush1.bf16.msra.mxu0 0
    %345 = vmatprep.subr.bf16.mxu0 0
    %346 = vmatpush1.bf16.msra.mxu0 0
    %347 = vmatprep.subr.bf16.mxu0 0
    %348 = vmatpush1.bf16.msra.mxu0 0
    %349 = vmatprep.subr.bf16.mxu0 0
    %350 = vmatpush1.bf16.msra.mxu0 0
    %351 = vmatprep.subr.bf16.mxu0 0
    %352 = vmatpush1.bf16.msra.mxu0 %v126
    %353 = vmatprep.subr.bf16.mxu0 0
    %354 = vmatpush1.bf16.msra.mxu0 %v125
    %355 = vmatprep.subr.bf16.mxu0 0
    %356 = vmatpush2.bf16.msra.mxu0 0
    %357 = vmatprep.subr.bf16.mxu0 0
    %358 = vmatpush2.bf16.msra.mxu0 0
    %359 = vmatprep.subr.bf16.mxu0 0
    %360 = vmatpush2.bf16.msra.mxu0 0
    %361 = vmatprep.subr.bf16.mxu0 0
    %362 = vmatpush2.bf16.msra.mxu0 0
    %363 = vmatprep.subr.bf16.mxu0 0
    %364 = vmatpush2.bf16.msra.mxu0 0
    %365 = vmatprep.subr.bf16.mxu0 0
    %366 = vmatpush2.bf16.msra.mxu0 0
    %367 = vmatprep.subr.bf16.mxu0 0
    %368 = vmatpush2.bf16.msra.mxu0 0
    %369 = vmatprep.subr.bf16.mxu0 0
    %370 = vmatpush2.bf16.msra.mxu0 0
    %371 = vmatprep.mubr.bf16.mxu0 0
    %372 = vmatmul.mubr.bf16.gmra.mxu0 %v215
    %v373 = vpop.f32.mrf.mxu0
    %v374 = vadd.f32 0.0, %v373
    %v375 = vpop.f32.mrf.mxu0
    %v376 = vpop.f32.mrf.mxu0
    %v377 = vpop.f32.mrf.mxu0
    %378 = vdwg.mxu0
    %v380 = vrot.slane %v374, 6
    %v382 = vadd.f32 %v111, %v380
    %v383 = vxor.u32 %v382, 2147483648
    %v384 = vmul.f32 %v383, 1.442695
    %v385 = vpow.pop %v384
    %v386 = vadd.f32 %v385, 1.0
    %v387 = vrcp.pop %v386
    %v388 = vmul.f32 1.0, %v387
    %v389 = vtanh.pop %v382
    %v391 = vrot.slane %v191, 6
    %v393 = vmul.f32 %v388, %v391
    %395 = vrot.lane.b32.xlu0 %v389, 32
    %v396 = vpop.permute.xlu0 %395
    %v398 = vmul.f32 %v388, %v396
    %400 = vrot.lane.b32.xlu0 %v398, 32
    %v401 = vpop.permute.xlu0 %400
    %v403 = vadd.f32 %v393, %v401
    %v404 = vtanh.pop %v403
    %406 = vrot.lane.b32.xlu0 %v404, 32
    %v407 = vpop.permute.xlu0 %406
    %v409 = vmul.f32 %v388, %v407
    %v410 = vpack.c.bf16 %v409, %v409
    %v412 = vrot.slane %v410, 1
    %413 = vrot.lane.b32.xlu0 %v412, 64
    %v414 = vpop.permute.xlu0 %413
    %v416 = vsel %vm129, %v414, 0
    %418 = vmatprep.subr.bf16.mxu0 0
    %419 = vmatpush1.bf16.msra.mxu0 0
    %420 = vmatprep.subr.bf16.mxu0 0
    %421 = vmatpush1.bf16.msra.mxu0 0
    %422 = vmatprep.subr.bf16.mxu0 0
    %423 = vmatpush1.bf16.msra.mxu0 0
    %424 = vmatprep.subr.bf16.mxu0 0
    %425 = vmatpush1.bf16.msra.mxu0 0
    %426 = vmatprep.subr.bf16.mxu0 0
    %427 = vmatpush1.bf16.msra.mxu0 0
    %428 = vmatprep.subr.bf16.mxu0 0
    %429 = vmatpush1.bf16.msra.mxu0 0
    %430 = vmatprep.subr.bf16.mxu0 0
    %431 = vmatpush1.bf16.msra.mxu0 %v211
    %432 = vmatprep.subr.bf16.mxu0 0
    %433 = vmatpush1.bf16.msra.mxu0 %v210
    %434 = vmatprep.subr.bf16.mxu0 0
    %435 = vmatpush2.bf16.msra.mxu0 0
    %436 = vmatprep.subr.bf16.mxu0 0
    %437 = vmatpush2.bf16.msra.mxu0 0
    %438 = vmatprep.subr.bf16.mxu0 0
    %439 = vmatpush2.bf16.msra.mxu0 0
    %440 = vmatprep.subr.bf16.mxu0 0
    %441 = vmatpush2.bf16.msra.mxu0 0
    %442 = vmatprep.subr.bf16.mxu0 0
    %443 = vmatpush2.bf16.msra.mxu0 0
    %444 = vmatprep.subr.bf16.mxu0 0
    %445 = vmatpush2.bf16.msra.mxu0 0
    %446 = vmatprep.subr.bf16.mxu0 0
    %447 = vmatpush2.bf16.msra.mxu0 0
    %448 = vmatprep.subr.bf16.mxu0 0
    %449 = vmatpush2.bf16.msra.mxu0 0
    %450 = vmatprep.mubr.bf16.mxu0 0
    %451 = vmatmul.mubr.bf16.gmra.mxu0 %v416
    %v452 = vpop.f32.mrf.mxu0
    %v453 = vadd.f32 %v51, %v452
    %v454 = vpop.f32.mrf.mxu0
    %v455 = vpop.f32.mrf.mxu0
    %v456 = vpop.f32.mrf.mxu0
    %457 = vdwg.mxu0
    %459 = vrot.lane.b32.xlu0 %v334, 64
    %v460 = vpop.permute.xlu0 %459
    %v462 = vsel %vm129, %v460, 0
    %464 = vmatprep.subr.bf16.mxu0 0
    %465 = vmatpush1.bf16.msra.mxu0 0
    %466 = vmatprep.subr.bf16.mxu0 0
    %467 = vmatpush1.bf16.msra.mxu0 0
    %468 = vmatprep.subr.bf16.mxu0 0
    %469 = vmatpush1.bf16.msra.mxu0 0
    %470 = vmatprep.subr.bf16.mxu0 0
    %471 = vmatpush1.bf16.msra.mxu0 0
    %472 = vmatprep.subr.bf16.mxu0 0
    %473 = vmatpush1.bf16.msra.mxu0 0
    %474 = vmatprep.subr.bf16.mxu0 0
    %475 = vmatpush1.bf16.msra.mxu0 0
    %476 = vmatprep.subr.bf16.mxu0 0
    %477 = vmatpush1.bf16.msra.mxu0 %v266
    %478 = vmatprep.subr.bf16.mxu0 0
    %479 = vmatpush1.bf16.msra.mxu0 %v265
    %480 = vmatprep.subr.bf16.mxu0 0
    %481 = vmatpush2.bf16.msra.mxu0 0
    %482 = vmatprep.subr.bf16.mxu0 0
    %483 = vmatpush2.bf16.msra.mxu0 0
    %484 = vmatprep.subr.bf16.mxu0 0
    %485 = vmatpush2.bf16.msra.mxu0 0
    %486 = vmatprep.subr.bf16.mxu0 0
    %487 = vmatpush2.bf16.msra.mxu0 0
    %488 = vmatprep.subr.bf16.mxu0 0
    %489 = vmatpush2.bf16.msra.mxu0 0
    %490 = vmatprep.subr.bf16.mxu0 0
    %491 = vmatpush2.bf16.msra.mxu0 0
    %492 = vmatprep.subr.bf16.mxu0 0
    %493 = vmatpush2.bf16.msra.mxu0 0
    %494 = vmatprep.subr.bf16.mxu0 0
    %495 = vmatpush2.bf16.msra.mxu0 0
    %496 = vmatprep.mubr.bf16.mxu0 0
    %497 = vmatmul.mubr.bf16.gmra.mxu0 %v462
    %v498 = vpop.f32.mrf.mxu0
    %v499 = vadd.f32 0.0, %v498
    %v500 = vpop.f32.mrf.mxu0
    %v501 = vpop.f32.mrf.mxu0
    %v502 = vpop.f32.mrf.mxu0
    %503 = vdwg.mxu0
    %v504 = vadd.f32 %v453, %v499
    %v505 = vxor.u32 %v504, 2147483648
    %v506 = vmul.f32 %v505, 1.442695
    %v507 = vpow.pop %v506
    %v508 = vadd.f32 %v507, 1.0
    %v509 = vrcp.pop %v508
    %v510 = vmul.f32 1.0, %v509
    %v511 = vtanh.pop %v504
    %v512 = vmul.f32 %v510, %v327
    %514 = vrot.lane.b32.xlu0 %v511, 32
    %v515 = vpop.permute.xlu0 %514
    %v517 = vmul.f32 %v510, %v515
    %519 = vrot.lane.b32.xlu0 %v517, 32
    %v520 = vpop.permute.xlu0 %519
    %v522 = vadd.f32 %v512, %v520
    %v523 = vtanh.pop %v522
    %525 = vrot.lane.b32.xlu0 %v523, 32
    %v526 = vpop.permute.xlu0 %525
    %v528 = vmul.f32 %v510, %v526
    %v529 = vpack.c.bf16 %v528, %v528
    %v530 = vld [vmem:[%s7 + $0x10] sm:$0xf]
    %v531 = vld [vmem:[%s7 + $0x14] sm:$0xf]
    %v532 = vld [vmem:[%s7 + $0x18] sm:$0xf]
    %v533 = vld [vmem:[%s7 + $0x1c] sm:$0xf]
    %535 = vrot.lane.b32.xlu0 %v529, 64
    %v536 = vpop.permute.xlu0 %535
    %v541 = vunpack.c.l.b16 %v530
    %v542 = vunpack.c.l.b16 %v531
    %v543 = vunpack.c.l.b16 %v532
    %v544 = vunpack.c.l.b16 %v533
    %v545 = vpack.c.b16 %v542, %v541
    %v546 = vpack.c.b16 %v544, %v543
    %v550 = vsel %vm129, %v536, 0
    %552 = vmatprep.subr.bf16.mxu0 0
    %553 = vmatpush1.bf16.msra.mxu0 0
    %554 = vmatprep.subr.bf16.mxu0 0
    %555 = vmatpush1.bf16.msra.mxu0 0
    %556 = vmatprep.subr.bf16.mxu0 0
    %557 = vmatpush1.bf16.msra.mxu0 0
    %558 = vmatprep.subr.bf16.mxu0 0
    %559 = vmatpush1.bf16.msra.mxu0 0
    %560 = vmatprep.subr.bf16.mxu0 0
    %561 = vmatpush1.bf16.msra.mxu0 0
    %562 = vmatprep.subr.bf16.mxu0 0
    %563 = vmatpush1.bf16.msra.mxu0 0
    %564 = vmatprep.subr.bf16.mxu0 0
    %565 = vmatpush1.bf16.msra.mxu0 %v546
    %566 = vmatprep.subr.bf16.mxu0 0
    %567 = vmatpush1.bf16.msra.mxu0 %v545
    %568 = vmatprep.subr.bf16.mxu0 0
    %569 = vmatpush2.bf16.msra.mxu0 0
    %570 = vmatprep.subr.bf16.mxu0 0
    %571 = vmatpush2.bf16.msra.mxu0 0
    %572 = vmatprep.subr.bf16.mxu0 0
    %573 = vmatpush2.bf16.msra.mxu0 0
    %574 = vmatprep.subr.bf16.mxu0 0
    %575 = vmatpush2.bf16.msra.mxu0 0
    %576 = vmatprep.subr.bf16.mxu0 0
    %577 = vmatpush2.bf16.msra.mxu0 0
    %578 = vmatprep.subr.bf16.mxu0 0
    %579 = vmatpush2.bf16.msra.mxu0 0
    %580 = vmatprep.subr.bf16.mxu0 0
    %581 = vmatpush2.bf16.msra.mxu0 0
    %582 = vmatprep.subr.bf16.mxu0 0
    %583 = vmatpush2.bf16.msra.mxu0 0
    %584 = vmatprep.mubr.bf16.mxu0 0
    %585 = vmatmul.mubr.bf16.gmra.mxu0 %v550
    %v586 = vpop.f32.mrf.mxu0
    %v587 = vadd.f32 0.0, %v586
    %v588 = vpop.f32.mrf.mxu0
    %v589 = vpop.f32.mrf.mxu0
    %v590 = vpop.f32.mrf.mxu0
    %591 = vdwg.mxu0
    %v596 = vunpack.c.l.b16 %v335
    %v597 = vunpack.c.l.b16 %v336
    %v598 = vunpack.c.l.b16 %v337
    %v599 = vunpack.c.l.b16 %v338
    %v600 = vpack.c.b16 %v597, %v596
    %v601 = vpack.c.b16 %v599, %v598
    %604 = vmatprep.subr.bf16.mxu0 0
    %605 = vmatpush1.bf16.msra.mxu0 0
    %606 = vmatprep.subr.bf16.mxu0 0
    %607 = vmatpush1.bf16.msra.mxu0 0
    %608 = vmatprep.subr.bf16.mxu0 0
    %609 = vmatpush1.bf16.msra.mxu0 0
    %610 = vmatprep.subr.bf16.mxu0 0
    %611 = vmatpush1.bf16.msra.mxu0 0
    %612 = vmatprep.subr.bf16.mxu0 0
    %613 = vmatpush1.bf16.msra.mxu0 0
    %614 = vmatprep.subr.bf16.mxu0 0
    %615 = vmatpush1.bf16.msra.mxu0 0
    %616 = vmatprep.subr.bf16.mxu0 0
    %617 = vmatpush1.bf16.msra.mxu0 %v601
    %618 = vmatprep.subr.bf16.mxu0 0
    %619 = vmatpush1.bf16.msra.mxu0 %v600
    %620 = vmatprep.subr.bf16.mxu0 0
    %621 = vmatpush2.bf16.msra.mxu0 0
    %622 = vmatprep.subr.bf16.mxu0 0
    %623 = vmatpush2.bf16.msra.mxu0 0
    %624 = vmatprep.subr.bf16.mxu0 0
    %625 = vmatpush2.bf16.msra.mxu0 0
    %626 = vmatprep.subr.bf16.mxu0 0
    %627 = vmatpush2.bf16.msra.mxu0 0
    %628 = vmatprep.subr.bf16.mxu0 0
    %629 = vmatpush2.bf16.msra.mxu0 0
    %630 = vmatprep.subr.bf16.mxu0 0
    %631 = vmatpush2.bf16.msra.mxu0 0
    %632 = vmatprep.subr.bf16.mxu0 0
    %633 = vmatpush2.bf16.msra.mxu0 0
    %634 = vmatprep.subr.bf16.mxu0 0
    %635 = vmatpush2.bf16.msra.mxu0 0
    %636 = vmatprep.mubr.bf16.mxu0 0
    %637 = vmatmul.mubr.bf16.gmra.mxu0 %v462
    %v638 = vpop.f32.mrf.mxu0
    %v639 = vadd.f32 %v587, %v638
    %v640 = vpop.f32.mrf.mxu0
    %v641 = vpop.f32.mrf.mxu0
    %v642 = vpop.f32.mrf.mxu0
    %643 = vdwg.mxu0
    %644 = vmatprep.subr.bf16.mxu0 0
    %645 = vmatpush1.bf16.msra.mxu0 0
    %646 = vmatprep.subr.bf16.mxu0 0
    %647 = vmatpush1.bf16.msra.mxu0 0
    %648 = vmatprep.subr.bf16.mxu0 0
    %649 = vmatpush1.bf16.msra.mxu0 0
    %650 = vmatprep.subr.bf16.mxu0 0
    %651 = vmatpush1.bf16.msra.mxu0 0
    %652 = vmatprep.subr.bf16.mxu0 0
    %653 = vmatpush1.bf16.msra.mxu0 0
    %654 = vmatprep.subr.bf16.mxu0 0
    %655 = vmatpush1.bf16.msra.mxu0 0
    %656 = vmatprep.subr.bf16.mxu0 0
    %657 = vmatpush1.bf16.msra.mxu0 %v126
    %658 = vmatprep.subr.bf16.mxu0 0
    %659 = vmatpush1.bf16.msra.mxu0 %v125
    %660 = vmatprep.subr.bf16.mxu0 0
    %661 = vmatpush2.bf16.msra.mxu0 0
    %662 = vmatprep.subr.bf16.mxu0 0
    %663 = vmatpush2.bf16.msra.mxu0 0
    %664 = vmatprep.subr.bf16.mxu0 0
    %665 = vmatpush2.bf16.msra.mxu0 0
    %666 = vmatprep.subr.bf16.mxu0 0
    %667 = vmatpush2.bf16.msra.mxu0 0
    %668 = vmatprep.subr.bf16.mxu0 0
    %669 = vmatpush2.bf16.msra.mxu0 0
    %670 = vmatprep.subr.bf16.mxu0 0
    %671 = vmatpush2.bf16.msra.mxu0 0
    %672 = vmatprep.subr.bf16.mxu0 0
    %673 = vmatpush2.bf16.msra.mxu0 0
    %674 = vmatprep.subr.bf16.mxu0 0
    %675 = vmatpush2.bf16.msra.mxu0 0
    %676 = vmatprep.mubr.bf16.mxu0 0
    %677 = vmatmul.mubr.bf16.gmra.mxu0 %v416
    %v678 = vpop.f32.mrf.mxu0
    %v679 = vadd.f32 0.0, %v678
    %v680 = vpop.f32.mrf.mxu0
    %v681 = vpop.f32.mrf.mxu0
    %v682 = vpop.f32.mrf.mxu0
    %683 = vdwg.mxu0
    %v685 = vrot.slane %v679, 4
    %v687 = vadd.f32 %v111, %v685
    %v688 = vxor.u32 %v687, 2147483648
    %v689 = vmul.f32 %v688, 1.442695
    %v690 = vpow.pop %v689
    %v691 = vadd.f32 %v690, 1.0
    %v692 = vrcp.pop %v691
    %v693 = vmul.f32 1.0, %v692
    %v694 = vtanh.pop %v687
    %v696 = vrot.slane %v403, 6
    %v698 = vmul.f32 %v693, %v696
    %700 = vrot.lane.b32.xlu0 %v694, 32
    %v701 = vpop.permute.xlu0 %700
    %v703 = vmul.f32 %v693, %v701
    %705 = vrot.lane.b32.xlu0 %v703, 32
    %v706 = vpop.permute.xlu0 %705
    %v708 = vadd.f32 %v698, %v706
    %v709 = vtanh.pop %v708
    %711 = vrot.lane.b32.xlu0 %v709, 32
    %v712 = vpop.permute.xlu0 %711
    %v714 = vmul.f32 %v693, %v712
    %v715 = vpack.c.bf16 %v714, %v714
    %v717 = vrot.slane %v715, 2
    %718 = vrot.lane.b32.xlu0 %v717, 64
    %v719 = vpop.permute.xlu0 %718
    %v721 = vsel %vm129, %v719, 0
    %723 = vmatprep.subr.bf16.mxu0 0
    %724 = vmatpush1.bf16.msra.mxu0 0
    %725 = vmatprep.subr.bf16.mxu0 0
    %726 = vmatpush1.bf16.msra.mxu0 0
    %727 = vmatprep.subr.bf16.mxu0 0
    %728 = vmatpush1.bf16.msra.mxu0 0
    %729 = vmatprep.subr.bf16.mxu0 0
    %730 = vmatpush1.bf16.msra.mxu0 0
    %731 = vmatprep.subr.bf16.mxu0 0
    %732 = vmatpush1.bf16.msra.mxu0 0
    %733 = vmatprep.subr.bf16.mxu0 0
    %734 = vmatpush1.bf16.msra.mxu0 0
    %735 = vmatprep.subr.bf16.mxu0 0
    %736 = vmatpush1.bf16.msra.mxu0 %v211
    %737 = vmatprep.subr.bf16.mxu0 0
    %738 = vmatpush1.bf16.msra.mxu0 %v210
    %739 = vmatprep.subr.bf16.mxu0 0
    %740 = vmatpush2.bf16.msra.mxu0 0
    %741 = vmatprep.subr.bf16.mxu0 0
    %742 = vmatpush2.bf16.msra.mxu0 0
    %743 = vmatprep.subr.bf16.mxu0 0
    %744 = vmatpush2.bf16.msra.mxu0 0
    %745 = vmatprep.subr.bf16.mxu0 0
    %746 = vmatpush2.bf16.msra.mxu0 0
    %747 = vmatprep.subr.bf16.mxu0 0
    %748 = vmatpush2.bf16.msra.mxu0 0
    %749 = vmatprep.subr.bf16.mxu0 0
    %750 = vmatpush2.bf16.msra.mxu0 0
    %751 = vmatprep.subr.bf16.mxu0 0
    %752 = vmatpush2.bf16.msra.mxu0 0
    %753 = vmatprep.subr.bf16.mxu0 0
    %754 = vmatpush2.bf16.msra.mxu0 0
    %755 = vmatprep.mubr.bf16.mxu0 0
    %756 = vmatmul.mubr.bf16.gmra.mxu0 %v721
    %v757 = vpop.f32.mrf.mxu0
    %v758 = vadd.f32 %v51, %v757
    %v759 = vpop.f32.mrf.mxu0
    %v760 = vpop.f32.mrf.mxu0
    %v761 = vpop.f32.mrf.mxu0
    %762 = vdwg.mxu0
    %763 = vmatprep.subr.bf16.mxu0 0
    %764 = vmatpush1.bf16.msra.mxu0 0
    %765 = vmatprep.subr.bf16.mxu0 0
    %766 = vmatpush1.bf16.msra.mxu0 0
    %767 = vmatprep.subr.bf16.mxu0 0
    %768 = vmatpush1.bf16.msra.mxu0 0
    %769 = vmatprep.subr.bf16.mxu0 0
    %770 = vmatpush1.bf16.msra.mxu0 0
    %771 = vmatprep.subr.bf16.mxu0 0
    %772 = vmatpush1.bf16.msra.mxu0 0
    %773 = vmatprep.subr.bf16.mxu0 0
    %774 = vmatpush1.bf16.msra.mxu0 0
    %775 = vmatprep.subr.bf16.mxu0 0
    %776 = vmatpush1.bf16.msra.mxu0 %v266
    %777 = vmatprep.subr.bf16.mxu0 0
    %778 = vmatpush1.bf16.msra.mxu0 %v265
    %779 = vmatprep.subr.bf16.mxu0 0
    %780 = vmatpush2.bf16.msra.mxu0 0
    %781 = vmatprep.subr.bf16.mxu0 0
    %782 = vmatpush2.bf16.msra.mxu0 0
    %783 = vmatprep.subr.bf16.mxu0 0
    %784 = vmatpush2.bf16.msra.mxu0 0
    %785 = vmatprep.subr.bf16.mxu0 0
    %786 = vmatpush2.bf16.msra.mxu0 0
    %787 = vmatprep.subr.bf16.mxu0 0
    %788 = vmatpush2.bf16.msra.mxu0 0
    %789 = vmatprep.subr.bf16.mxu0 0
    %790 = vmatpush2.bf16.msra.mxu0 0
    %791 = vmatprep.subr.bf16.mxu0 0
    %792 = vmatpush2.bf16.msra.mxu0 0
    %793 = vmatprep.subr.bf16.mxu0 0
    %794 = vmatpush2.bf16.msra.mxu0 0
    %795 = vmatprep.mubr.bf16.mxu0 0
    %796 = vmatmul.mubr.bf16.gmra.mxu0 %v550
    %v797 = vpop.f32.mrf.mxu0
    %v798 = vadd.f32 0.0, %v797
    %v799 = vpop.f32.mrf.mxu0
    %v800 = vpop.f32.mrf.mxu0
    %v801 = vpop.f32.mrf.mxu0
    %802 = vdwg.mxu0
    %v803 = vadd.f32 %v758, %v798
    %v804 = vxor.u32 %v803, 2147483648
    %v805 = vmul.f32 %v804, 1.442695
    %v806 = vpow.pop %v805
    %v807 = vadd.f32 %v806, 1.0
    %v808 = vrcp.pop %v807
    %v809 = vmul.f32 1.0, %v808
    %v810 = vtanh.pop %v803
    %v811 = vmul.f32 %v809, %v522
    %813 = vrot.lane.b32.xlu0 %v810, 32
    %v814 = vpop.permute.xlu0 %813
    %v816 = vmul.f32 %v809, %v814
    %818 = vrot.lane.b32.xlu0 %v816, 32
    %v819 = vpop.permute.xlu0 %818
    %v821 = vadd.f32 %v811, %v819
    %v822 = vtanh.pop %v821
    %824 = vrot.lane.b32.xlu0 %v822, 32
    %v825 = vpop.permute.xlu0 %824
    %v827 = vmul.f32 %v809, %v825
    %v828 = vpack.c.bf16 %v827, %v827
    %v829 = vld [vmem:[%s7 + $0x20] sm:$0xf]
    %v830 = vld [vmem:[%s7 + $0x24] sm:$0xf]
    %v831 = vld [vmem:[%s7 + $0x28] sm:$0xf]
    %v832 = vld [vmem:[%s7 + $0x2c] sm:$0xf]
    %834 = vrot.lane.b32.xlu0 %v828, 64
    %v835 = vpop.permute.xlu0 %834
    %v840 = vunpack.c.l.b16 %v829
    %v841 = vunpack.c.l.b16 %v830
    %v842 = vunpack.c.l.b16 %v831
    %v843 = vunpack.c.l.b16 %v832
    %v844 = vpack.c.b16 %v841, %v840
    %v845 = vpack.c.b16 %v843, %v842
    %v849 = vsel %vm129, %v835, 0
    %851 = vmatprep.subr.bf16.mxu0 0
    %852 = vmatpush1.bf16.msra.mxu0 0
    %853 = vmatprep.subr.bf16.mxu0 0
    %854 = vmatpush1.bf16.msra.mxu0 0
    %855 = vmatprep.subr.bf16.mxu0 0
    %856 = vmatpush1.bf16.msra.mxu0 0
    %857 = vmatprep.subr.bf16.mxu0 0
    %858 = vmatpush1.bf16.msra.mxu0 0
    %859 = vmatprep.subr.bf16.mxu0 0
    %860 = vmatpush1.bf16.msra.mxu0 0
    %861 = vmatprep.subr.bf16.mxu0 0
    %862 = vmatpush1.bf16.msra.mxu0 0
    %863 = vmatprep.subr.bf16.mxu0 0
    %864 = vmatpush1.bf16.msra.mxu0 %v845
    %865 = vmatprep.subr.bf16.mxu0 0
    %866 = vmatpush1.bf16.msra.mxu0 %v844
    %867 = vmatprep.subr.bf16.mxu0 0
    %868 = vmatpush2.bf16.msra.mxu0 0
    %869 = vmatprep.subr.bf16.mxu0 0
    %870 = vmatpush2.bf16.msra.mxu0 0
    %871 = vmatprep.subr.bf16.mxu0 0
    %872 = vmatpush2.bf16.msra.mxu0 0
    %873 = vmatprep.subr.bf16.mxu0 0
    %874 = vmatpush2.bf16.msra.mxu0 0
    %875 = vmatprep.subr.bf16.mxu0 0
    %876 = vmatpush2.bf16.msra.mxu0 0
    %877 = vmatprep.subr.bf16.mxu0 0
    %878 = vmatpush2.bf16.msra.mxu0 0
    %879 = vmatprep.subr.bf16.mxu0 0
    %880 = vmatpush2.bf16.msra.mxu0 0
    %881 = vmatprep.subr.bf16.mxu0 0
    %882 = vmatpush2.bf16.msra.mxu0 0
    %883 = vmatprep.mubr.bf16.mxu0 0
    %884 = vmatmul.mubr.bf16.gmra.mxu0 %v849
    %v885 = vpop.f32.mrf.mxu0
    %v886 = vadd.f32 0.0, %v885
    %v887 = vpop.f32.mrf.mxu0
    %v888 = vpop.f32.mrf.mxu0
    %v889 = vpop.f32.mrf.mxu0
    %890 = vdwg.mxu0
    %v891 = vadd.f32 %v639, %v886
    %892 = vmatprep.subr.bf16.mxu0 0
    %893 = vmatpush1.bf16.msra.mxu0 0
    %894 = vmatprep.subr.bf16.mxu0 0
    %895 = vmatpush1.bf16.msra.mxu0 0
    %896 = vmatprep.subr.bf16.mxu0 0
    %897 = vmatpush1.bf16.msra.mxu0 0
    %898 = vmatprep.subr.bf16.mxu0 0
    %899 = vmatpush1.bf16.msra.mxu0 0
    %900 = vmatprep.subr.bf16.mxu0 0
    %901 = vmatpush1.bf16.msra.mxu0 0
    %902 = vmatprep.subr.bf16.mxu0 0
    %903 = vmatpush1.bf16.msra.mxu0 0
    %904 = vmatprep.subr.bf16.mxu0 0
    %905 = vmatpush1.bf16.msra.mxu0 %v126
    %906 = vmatprep.subr.bf16.mxu0 0
    %907 = vmatpush1.bf16.msra.mxu0 %v125
    %908 = vmatprep.subr.bf16.mxu0 0
    %909 = vmatpush2.bf16.msra.mxu0 0
    %910 = vmatprep.subr.bf16.mxu0 0
    %911 = vmatpush2.bf16.msra.mxu0 0
    %912 = vmatprep.subr.bf16.mxu0 0
    %913 = vmatpush2.bf16.msra.mxu0 0
    %914 = vmatprep.subr.bf16.mxu0 0
    %915 = vmatpush2.bf16.msra.mxu0 0
    %916 = vmatprep.subr.bf16.mxu0 0
    %917 = vmatpush2.bf16.msra.mxu0 0
    %918 = vmatprep.subr.bf16.mxu0 0
    %919 = vmatpush2.bf16.msra.mxu0 0
    %920 = vmatprep.subr.bf16.mxu0 0
    %921 = vmatpush2.bf16.msra.mxu0 0
    %922 = vmatprep.subr.bf16.mxu0 0
    %923 = vmatpush2.bf16.msra.mxu0 0
    %924 = vmatprep.mubr.bf16.mxu0 0
    %925 = vmatmul.mubr.bf16.gmra.mxu0 %v721
    %v926 = vpop.f32.mrf.mxu0
    %v927 = vadd.f32 0.0, %v926
    %v928 = vpop.f32.mrf.mxu0
    %v929 = vpop.f32.mrf.mxu0
    %v930 = vpop.f32.mrf.mxu0
    %931 = vdwg.mxu0
    %v933 = vrot.slane %v927, 2
    %v935 = vadd.f32 %v111, %v933
    %v936 = vxor.u32 %v935, 2147483648
    %v937 = vmul.f32 %v936, 1.442695
    %v938 = vpow.pop %v937
    %v939 = vadd.f32 %v938, 1.0
    %v940 = vrcp.pop %v939
    %v941 = vmul.f32 1.0, %v940
    %v942 = vtanh.pop %v935
    %v944 = vrot.slane %v708, 6
    %v946 = vmul.f32 %v941, %v944
    %948 = vrot.lane.b32.xlu0 %v942, 32
    %v949 = vpop.permute.xlu0 %948
    %v951 = vmul.f32 %v941, %v949
    %953 = vrot.lane.b32.xlu0 %v951, 32
    %v954 = vpop.permute.xlu0 %953
    %v956 = vadd.f32 %v946, %v954
    %v957 = vtanh.pop %v956
    %959 = vrot.lane.b32.xlu0 %v957, 32
    %v960 = vpop.permute.xlu0 %959
    %v962 = vmul.f32 %v941, %v960
    %v963 = vpack.c.bf16 %v962, %v962
    %v965 = vrot.slane %v963, 3
    %966 = vrot.lane.b32.xlu0 %v965, 64
    %v967 = vpop.permute.xlu0 %966
    %v969 = vsel %vm129, %v967, 0
    %971 = vmatprep.subr.bf16.mxu0 0
    %972 = vmatpush1.bf16.msra.mxu0 0
    %973 = vmatprep.subr.bf16.mxu0 0
    %974 = vmatpush1.bf16.msra.mxu0 0
    %975 = vmatprep.subr.bf16.mxu0 0
    %976 = vmatpush1.bf16.msra.mxu0 0
    %977 = vmatprep.subr.bf16.mxu0 0
    %978 = vmatpush1.bf16.msra.mxu0 0
    %979 = vmatprep.subr.bf16.mxu0 0
    %980 = vmatpush1.bf16.msra.mxu0 0
    %981 = vmatprep.subr.bf16.mxu0 0
    %982 = vmatpush1.bf16.msra.mxu0 0
    %983 = vmatprep.subr.bf16.mxu0 0
    %984 = vmatpush1.bf16.msra.mxu0 %v211
    %985 = vmatprep.subr.bf16.mxu0 0
    %986 = vmatpush1.bf16.msra.mxu0 %v210
    %987 = vmatprep.subr.bf16.mxu0 0
    %988 = vmatpush2.bf16.msra.mxu0 0
    %989 = vmatprep.subr.bf16.mxu0 0
    %990 = vmatpush2.bf16.msra.mxu0 0
    %991 = vmatprep.subr.bf16.mxu0 0
    %992 = vmatpush2.bf16.msra.mxu0 0
    %993 = vmatprep.subr.bf16.mxu0 0
    %994 = vmatpush2.bf16.msra.mxu0 0
    %995 = vmatprep.subr.bf16.mxu0 0
    %996 = vmatpush2.bf16.msra.mxu0 0
    %997 = vmatprep.subr.bf16.mxu0 0
    %998 = vmatpush2.bf16.msra.mxu0 0
    %999 = vmatprep.subr.bf16.mxu0 0
    %1000 = vmatpush2.bf16.msra.mxu0 0
    %1001 = vmatprep.subr.bf16.mxu0 0
    %1002 = vmatpush2.bf16.msra.mxu0 0
    %1003 = vmatprep.mubr.bf16.mxu0 0
    %1004 = vmatmul.mubr.bf16.gmra.mxu0 %v969
    %v1005 = vpop.f32.mrf.mxu0
    %v1006 = vadd.f32 %v51, %v1005
    %v1007 = vpop.f32.mrf.mxu0
    %v1008 = vpop.f32.mrf.mxu0
    %v1009 = vpop.f32.mrf.mxu0
    %1010 = vdwg.mxu0
    %1011 = vmatprep.subr.bf16.mxu0 0
    %1012 = vmatpush1.bf16.msra.mxu0 0
    %1013 = vmatprep.subr.bf16.mxu0 0
    %1014 = vmatpush1.bf16.msra.mxu0 0
    %1015 = vmatprep.subr.bf16.mxu0 0
    %1016 = vmatpush1.bf16.msra.mxu0 0
    %1017 = vmatprep.subr.bf16.mxu0 0
    %1018 = vmatpush1.bf16.msra.mxu0 0
    %1019 = vmatprep.subr.bf16.mxu0 0
    %1020 = vmatpush1.bf16.msra.mxu0 0
    %1021 = vmatprep.subr.bf16.mxu0 0
    %1022 = vmatpush1.bf16.msra.mxu0 0
    %1023 = vmatprep.subr.bf16.mxu0 0
    %1024 = vmatpush1.bf16.msra.mxu0 %v266
    %1025 = vmatprep.subr.bf16.mxu0 0
    %1026 = vmatpush1.bf16.msra.mxu0 %v265
    %1027 = vmatprep.subr.bf16.mxu0 0
    %1028 = vmatpush2.bf16.msra.mxu0 0
    %1029 = vmatprep.subr.bf16.mxu0 0
    %1030 = vmatpush2.bf16.msra.mxu0 0
    %1031 = vmatprep.subr.bf16.mxu0 0
    %1032 = vmatpush2.bf16.msra.mxu0 0
    %1033 = vmatprep.subr.bf16.mxu0 0
    %1034 = vmatpush2.bf16.msra.mxu0 0
    %1035 = vmatprep.subr.bf16.mxu0 0
    %1036 = vmatpush2.bf16.msra.mxu0 0
    %1037 = vmatprep.subr.bf16.mxu0 0
    %1038 = vmatpush2.bf16.msra.mxu0 0
    %1039 = vmatprep.subr.bf16.mxu0 0
    %1040 = vmatpush2.bf16.msra.mxu0 0
    %1041 = vmatprep.subr.bf16.mxu0 0
    %1042 = vmatpush2.bf16.msra.mxu0 0
    %1043 = vmatprep.mubr.bf16.mxu0 0
    %1044 = vmatmul.mubr.bf16.gmra.mxu0 %v849
    %v1045 = vpop.f32.mrf.mxu0
    %v1046 = vadd.f32 0.0, %v1045
    %v1047 = vpop.f32.mrf.mxu0
    %v1048 = vpop.f32.mrf.mxu0
    %v1049 = vpop.f32.mrf.mxu0
    %1050 = vdwg.mxu0
    %v1051 = vadd.f32 %v1006, %v1046
    %v1052 = vxor.u32 %v1051, 2147483648
    %v1053 = vmul.f32 %v1052, 1.442695
    %v1054 = vpow.pop %v1053
    %v1055 = vadd.f32 %v1054, 1.0
    %v1056 = vrcp.pop %v1055
    %v1057 = vmul.f32 1.0, %v1056
    %v1058 = vtanh.pop %v1051
    %v1059 = vmul.f32 %v1057, %v821
    %1061 = vrot.lane.b32.xlu0 %v1058, 32
    %v1062 = vpop.permute.xlu0 %1061
    %v1064 = vmul.f32 %v1057, %v1062
    %1066 = vrot.lane.b32.xlu0 %v1064, 32
    %v1067 = vpop.permute.xlu0 %1066
    %v1069 = vadd.f32 %v1059, %v1067
    %v1070 = vtanh.pop %v1069
    %1072 = vrot.lane.b32.xlu0 %v1070, 32
    %v1073 = vpop.permute.xlu0 %1072
    %v1075 = vmul.f32 %v1057, %v1073
    %v1076 = vpack.c.bf16 %v1075, %v1075
    %v1077 = vld [vmem:[%s7 + $0x30] sm:$0xf]
    %v1078 = vld [vmem:[%s7 + $0x34] sm:$0xf]
    %v1079 = vld [vmem:[%s7 + $0x38] sm:$0xf]
    %v1080 = vld [vmem:[%s7 + $0x3c] sm:$0xf]
    %1082 = vrot.lane.b32.xlu0 %v1076, 64
    %v1083 = vpop.permute.xlu0 %1082
    %v1088 = vunpack.c.l.b16 %v1077
    %v1089 = vunpack.c.l.b16 %v1078
    %v1090 = vunpack.c.l.b16 %v1079
    %v1091 = vunpack.c.l.b16 %v1080
    %v1092 = vpack.c.b16 %v1089, %v1088
    %v1093 = vpack.c.b16 %v1091, %v1090
    %v1097 = vsel %vm129, %v1083, 0
    %1099 = vmatprep.subr.bf16.mxu0 0
    %1100 = vmatpush1.bf16.msra.mxu0 0
    %1101 = vmatprep.subr.bf16.mxu0 0
    %1102 = vmatpush1.bf16.msra.mxu0 0
    %1103 = vmatprep.subr.bf16.mxu0 0
    %1104 = vmatpush1.bf16.msra.mxu0 0
    %1105 = vmatprep.subr.bf16.mxu0 0
    %1106 = vmatpush1.bf16.msra.mxu0 0
    %1107 = vmatprep.subr.bf16.mxu0 0
    %1108 = vmatpush1.bf16.msra.mxu0 0
    %1109 = vmatprep.subr.bf16.mxu0 0
    %1110 = vmatpush1.bf16.msra.mxu0 0
    %1111 = vmatprep.subr.bf16.mxu0 0
    %1112 = vmatpush1.bf16.msra.mxu0 %v1093
    %1113 = vmatprep.subr.bf16.mxu0 0
    %1114 = vmatpush1.bf16.msra.mxu0 %v1092
    %1115 = vmatprep.subr.bf16.mxu0 0
    %1116 = vmatpush2.bf16.msra.mxu0 0
    %1117 = vmatprep.subr.bf16.mxu0 0
    %1118 = vmatpush2.bf16.msra.mxu0 0
    %1119 = vmatprep.subr.bf16.mxu0 0
    %1120 = vmatpush2.bf16.msra.mxu0 0
    %1121 = vmatprep.subr.bf16.mxu0 0
    %1122 = vmatpush2.bf16.msra.mxu0 0
    %1123 = vmatprep.subr.bf16.mxu0 0
    %1124 = vmatpush2.bf16.msra.mxu0 0
    %1125 = vmatprep.subr.bf16.mxu0 0
    %1126 = vmatpush2.bf16.msra.mxu0 0
    %1127 = vmatprep.subr.bf16.mxu0 0
    %1128 = vmatpush2.bf16.msra.mxu0 0
    %1129 = vmatprep.subr.bf16.mxu0 0
    %1130 = vmatpush2.bf16.msra.mxu0 0
    %1131 = vmatprep.mubr.bf16.mxu0 0
    %1132 = vmatmul.mubr.bf16.gmra.mxu0 %v1097
    %v1133 = vpop.f32.mrf.mxu0
    %v1134 = vadd.f32 0.0, %v1133
    %v1135 = vpop.f32.mrf.mxu0
    %v1136 = vpop.f32.mrf.mxu0
    %v1137 = vpop.f32.mrf.mxu0
    %1138 = vdwg.mxu0
    %v1139 = vadd.f32 %v891, %v1134
    %1140 = vmatprep.subr.bf16.mxu0 0
    %1141 = vmatpush1.bf16.msra.mxu0 0
    %1142 = vmatprep.subr.bf16.mxu0 0
    %1143 = vmatpush1.bf16.msra.mxu0 0
    %1144 = vmatprep.subr.bf16.mxu0 0
    %1145 = vmatpush1.bf16.msra.mxu0 0
    %1146 = vmatprep.subr.bf16.mxu0 0
    %1147 = vmatpush1.bf16.msra.mxu0 0
    %1148 = vmatprep.subr.bf16.mxu0 0
    %1149 = vmatpush1.bf16.msra.mxu0 0
    %1150 = vmatprep.subr.bf16.mxu0 0
    %1151 = vmatpush1.bf16.msra.mxu0 0
    %1152 = vmatprep.subr.bf16.mxu0 0
    %1153 = vmatpush1.bf16.msra.mxu0 %v126
    %1154 = vmatprep.subr.bf16.mxu0 0
    %1155 = vmatpush1.bf16.msra.mxu0 %v125
    %1156 = vmatprep.subr.bf16.mxu0 0
    %1157 = vmatpush2.bf16.msra.mxu0 0
    %1158 = vmatprep.subr.bf16.mxu0 0
    %1159 = vmatpush2.bf16.msra.mxu0 0
    %1160 = vmatprep.subr.bf16.mxu0 0
    %1161 = vmatpush2.bf16.msra.mxu0 0
    %1162 = vmatprep.subr.bf16.mxu0 0
    %1163 = vmatpush2.bf16.msra.mxu0 0
    %1164 = vmatprep.subr.bf16.mxu0 0
    %1165 = vmatpush2.bf16.msra.mxu0 0
    %1166 = vmatprep.subr.bf16.mxu0 0
    %1167 = vmatpush2.bf16.msra.mxu0 0
    %1168 = vmatprep.subr.bf16.mxu0 0
    %1169 = vmatpush2.bf16.msra.mxu0 0
    %1170 = vmatprep.subr.bf16.mxu0 0
    %1171 = vmatpush2.bf16.msra.mxu0 0
    %1172 = vmatprep.mubr.bf16.mxu0 0
    %1173 = vmatmul.mubr.bf16.gmra.mxu0 %v969
    %v1174 = vpop.f32.mrf.mxu0
    %v1175 = vadd.f32 0.0, %v1174
    %v1176 = vpop.f32.mrf.mxu0
    %v1177 = vpop.f32.mrf.mxu0
    %v1178 = vpop.f32.mrf.mxu0
    %1179 = vdwg.mxu0
    %v1180 = vadd.f32 %v114, %v1175
    %v1181 = vxor.u32 %v1180, 2147483648
    %v1182 = vmul.f32 %v1181, 1.442695
    %v1183 = vpow.pop %v1182
    %v1184 = vadd.f32 %v1183, 1.0
    %v1185 = vrcp.pop %v1184
    %v1186 = vmul.f32 1.0, %v1185
    %v1187 = vtanh.pop %v1180
    %v1189 = vrot.slane %v956, 6
    %v1191 = vmul.f32 %v1186, %v1189
    %1193 = vrot.lane.b32.xlu0 %v1187, 32
    %v1194 = vpop.permute.xlu0 %1193
    %v1196 = vmul.f32 %v1186, %v1194
    %1198 = vrot.lane.b32.xlu0 %v1196, 32
    %v1199 = vpop.permute.xlu0 %1198
    %v1201 = vadd.f32 %v1191, %v1199
    %v1202 = vtanh.pop %v1201
    %1204 = vrot.lane.b32.xlu0 %v1202, 32
    %v1205 = vpop.permute.xlu0 %1204
    %v1207 = vmul.f32 %v1186, %v1205
    %v1208 = vpack.c.bf16 %v1207, %v1207
    %1210 = vrot.lane.b32.xlu0 %v1208, 64
    %v1211 = vpop.permute.xlu0 %1210
    %v1213 = vsel %vm129, %v1211, 0
    %1215 = vmatprep.subr.bf16.mxu0 0
    %1216 = vmatpush1.bf16.msra.mxu0 0
    %1217 = vmatprep.subr.bf16.mxu0 0
    %1218 = vmatpush1.bf16.msra.mxu0 0
    %1219 = vmatprep.subr.bf16.mxu0 0
    %1220 = vmatpush1.bf16.msra.mxu0 0
    %1221 = vmatprep.subr.bf16.mxu0 0
    %1222 = vmatpush1.bf16.msra.mxu0 0
    %1223 = vmatprep.subr.bf16.mxu0 0
    %1224 = vmatpush1.bf16.msra.mxu0 0
    %1225 = vmatprep.subr.bf16.mxu0 0
    %1226 = vmatpush1.bf16.msra.mxu0 0
    %1227 = vmatprep.subr.bf16.mxu0 0
    %1228 = vmatpush1.bf16.msra.mxu0 %v211
    %1229 = vmatprep.subr.bf16.mxu0 0
    %1230 = vmatpush1.bf16.msra.mxu0 %v210
    %1231 = vmatprep.subr.bf16.mxu0 0
    %1232 = vmatpush2.bf16.msra.mxu0 0
    %1233 = vmatprep.subr.bf16.mxu0 0
    %1234 = vmatpush2.bf16.msra.mxu0 0
    %1235 = vmatprep.subr.bf16.mxu0 0
    %1236 = vmatpush2.bf16.msra.mxu0 0
    %1237 = vmatprep.subr.bf16.mxu0 0
    %1238 = vmatpush2.bf16.msra.mxu0 0
    %1239 = vmatprep.subr.bf16.mxu0 0
    %1240 = vmatpush2.bf16.msra.mxu0 0
    %1241 = vmatprep.subr.bf16.mxu0 0
    %1242 = vmatpush2.bf16.msra.mxu0 0
    %1243 = vmatprep.subr.bf16.mxu0 0
    %1244 = vmatpush2.bf16.msra.mxu0 0
    %1245 = vmatprep.subr.bf16.mxu0 0
    %1246 = vmatpush2.bf16.msra.mxu0 0
    %1247 = vmatprep.mubr.bf16.mxu0 0
    %1248 = vmatmul.mubr.bf16.gmra.mxu0 %v1213
    %v1249 = vpop.f32.mrf.mxu0
    %v1250 = vadd.f32 %v51, %v1249
    %v1251 = vpop.f32.mrf.mxu0
    %v1252 = vpop.f32.mrf.mxu0
    %v1253 = vpop.f32.mrf.mxu0
    %1254 = vdwg.mxu0
    %1255 = vmatprep.subr.bf16.mxu0 0
    %1256 = vmatpush1.bf16.msra.mxu0 0
    %1257 = vmatprep.subr.bf16.mxu0 0
    %1258 = vmatpush1.bf16.msra.mxu0 0
    %1259 = vmatprep.subr.bf16.mxu0 0
    %1260 = vmatpush1.bf16.msra.mxu0 0
    %1261 = vmatprep.subr.bf16.mxu0 0
    %1262 = vmatpush1.bf16.msra.mxu0 0
    %1263 = vmatprep.subr.bf16.mxu0 0
    %1264 = vmatpush1.bf16.msra.mxu0 0
    %1265 = vmatprep.subr.bf16.mxu0 0
    %1266 = vmatpush1.bf16.msra.mxu0 0
    %1267 = vmatprep.subr.bf16.mxu0 0
    %1268 = vmatpush1.bf16.msra.mxu0 %v266
    %1269 = vmatprep.subr.bf16.mxu0 0
    %1270 = vmatpush1.bf16.msra.mxu0 %v265
    %1271 = vmatprep.subr.bf16.mxu0 0
    %1272 = vmatpush2.bf16.msra.mxu0 0
    %1273 = vmatprep.subr.bf16.mxu0 0
    %1274 = vmatpush2.bf16.msra.mxu0 0
    %1275 = vmatprep.subr.bf16.mxu0 0
    %1276 = vmatpush2.bf16.msra.mxu0 0
    %1277 = vmatprep.subr.bf16.mxu0 0
    %1278 = vmatpush2.bf16.msra.mxu0 0
    %1279 = vmatprep.subr.bf16.mxu0 0
    %1280 = vmatpush2.bf16.msra.mxu0 0
    %1281 = vmatprep.subr.bf16.mxu0 0
    %1282 = vmatpush2.bf16.msra.mxu0 0
    %1283 = vmatprep.subr.bf16.mxu0 0
    %1284 = vmatpush2.bf16.msra.mxu0 0
    %1285 = vmatprep.subr.bf16.mxu0 0
    %1286 = vmatpush2.bf16.msra.mxu0 0
    %1287 = vmatprep.mubr.bf16.mxu0 0
    %1288 = vmatmul.mubr.bf16.gmra.mxu0 %v1097
    %v1289 = vpop.f32.mrf.mxu0
    %v1290 = vadd.f32 0.0, %v1289
    %v1291 = vpop.f32.mrf.mxu0
    %v1292 = vpop.f32.mrf.mxu0
    %v1293 = vpop.f32.mrf.mxu0
    %1294 = vdwg.mxu0
    %v1295 = vadd.f32 %v1250, %v1290
    %v1296 = vxor.u32 %v1295, 2147483648
    %v1297 = vmul.f32 %v1296, 1.442695
    %v1298 = vpow.pop %v1297
    %v1299 = vadd.f32 %v1298, 1.0
    %v1300 = vrcp.pop %v1299
    %v1301 = vmul.f32 1.0, %v1300
    %v1302 = vtanh.pop %v1295
    %v1303 = vmul.f32 %v1301, %v1069
    %1305 = vrot.lane.b32.xlu0 %v1302, 32
    %v1306 = vpop.permute.xlu0 %1305
    %v1308 = vmul.f32 %v1301, %v1306
    %1310 = vrot.lane.b32.xlu0 %v1308, 32
    %v1311 = vpop.permute.xlu0 %1310
    %v1313 = vadd.f32 %v1303, %v1311
    %v1314 = vtanh.pop %v1313
    %1316 = vrot.lane.b32.xlu0 %v1314, 32
    %v1317 = vpop.permute.xlu0 %1316
    %v1319 = vmul.f32 %v1301, %v1317
    %v1320 = vpack.c.bf16 %v1319, %v1319
    %v1321 = vld [vmem:[%s7 + $0x40] sm:$0xf]
    %v1322 = vld [vmem:[%s7 + $0x44] sm:$0xf]
    %v1323 = vld [vmem:[%s7 + $0x48] sm:$0xf]
    %v1324 = vld [vmem:[%s7 + $0x4c] sm:$0xf]
    %1326 = vrot.lane.b32.xlu0 %v1320, 64
    %v1327 = vpop.permute.xlu0 %1326
    %v1332 = vunpack.c.l.b16 %v1321
    %v1333 = vunpack.c.l.b16 %v1322
    %v1334 = vunpack.c.l.b16 %v1323
    %v1335 = vunpack.c.l.b16 %v1324
    %v1336 = vpack.c.b16 %v1333, %v1332
    %v1337 = vpack.c.b16 %v1335, %v1334
    %v1341 = vsel %vm129, %v1327, 0
    %1343 = vmatprep.subr.bf16.mxu0 0
    %1344 = vmatpush1.bf16.msra.mxu0 0
    %1345 = vmatprep.subr.bf16.mxu0 0
    %1346 = vmatpush1.bf16.msra.mxu0 0
    %1347 = vmatprep.subr.bf16.mxu0 0
    %1348 = vmatpush1.bf16.msra.mxu0 0
    %1349 = vmatprep.subr.bf16.mxu0 0
    %1350 = vmatpush1.bf16.msra.mxu0 0
    %1351 = vmatprep.subr.bf16.mxu0 0
    %1352 = vmatpush1.bf16.msra.mxu0 0
    %1353 = vmatprep.subr.bf16.mxu0 0
    %1354 = vmatpush1.bf16.msra.mxu0 0
    %1355 = vmatprep.subr.bf16.mxu0 0
    %1356 = vmatpush1.bf16.msra.mxu0 %v1337
    %1357 = vmatprep.subr.bf16.mxu0 0
    %1358 = vmatpush1.bf16.msra.mxu0 %v1336
    %1359 = vmatprep.subr.bf16.mxu0 0
    %1360 = vmatpush2.bf16.msra.mxu0 0
    %1361 = vmatprep.subr.bf16.mxu0 0
    %1362 = vmatpush2.bf16.msra.mxu0 0
    %1363 = vmatprep.subr.bf16.mxu0 0
    %1364 = vmatpush2.bf16.msra.mxu0 0
    %1365 = vmatprep.subr.bf16.mxu0 0
    %1366 = vmatpush2.bf16.msra.mxu0 0
    %1367 = vmatprep.subr.bf16.mxu0 0
    %1368 = vmatpush2.bf16.msra.mxu0 0
    %1369 = vmatprep.subr.bf16.mxu0 0
    %1370 = vmatpush2.bf16.msra.mxu0 0
    %1371 = vmatprep.subr.bf16.mxu0 0
    %1372 = vmatpush2.bf16.msra.mxu0 0
    %1373 = vmatprep.subr.bf16.mxu0 0
    %1374 = vmatpush2.bf16.msra.mxu0 0
    %1375 = vmatprep.mubr.bf16.mxu0 0
    %1376 = vmatmul.mubr.bf16.gmra.mxu0 %v1341
    %v1377 = vpop.f32.mrf.mxu0
    %v1378 = vadd.f32 0.0, %v1377
    %v1379 = vpop.f32.mrf.mxu0
    %v1380 = vpop.f32.mrf.mxu0
    %v1381 = vpop.f32.mrf.mxu0
    %1382 = vdwg.mxu0
    %v1383 = vadd.f32 %v1139, %v1378
    %1384 = vmatprep.subr.bf16.mxu0 0
    %1385 = vmatpush1.bf16.msra.mxu0 0
    %1386 = vmatprep.subr.bf16.mxu0 0
    %1387 = vmatpush1.bf16.msra.mxu0 0
    %1388 = vmatprep.subr.bf16.mxu0 0
    %1389 = vmatpush1.bf16.msra.mxu0 0
    %1390 = vmatprep.subr.bf16.mxu0 0
    %1391 = vmatpush1.bf16.msra.mxu0 0
    %1392 = vmatprep.subr.bf16.mxu0 0
    %1393 = vmatpush1.bf16.msra.mxu0 0
    %1394 = vmatprep.subr.bf16.mxu0 0
    %1395 = vmatpush1.bf16.msra.mxu0 0
    %1396 = vmatprep.subr.bf16.mxu0 0
    %1397 = vmatpush1.bf16.msra.mxu0 %v126
    %1398 = vmatprep.subr.bf16.mxu0 0
    %1399 = vmatpush1.bf16.msra.mxu0 %v125
    %1400 = vmatprep.subr.bf16.mxu0 0
    %1401 = vmatpush2.bf16.msra.mxu0 0
    %1402 = vmatprep.subr.bf16.mxu0 0
    %1403 = vmatpush2.bf16.msra.mxu0 0
    %1404 = vmatprep.subr.bf16.mxu0 0
    %1405 = vmatpush2.bf16.msra.mxu0 0
    %1406 = vmatprep.subr.bf16.mxu0 0
    %1407 = vmatpush2.bf16.msra.mxu0 0
    %1408 = vmatprep.subr.bf16.mxu0 0
    %1409 = vmatpush2.bf16.msra.mxu0 0
    %1410 = vmatprep.subr.bf16.mxu0 0
    %1411 = vmatpush2.bf16.msra.mxu0 0
    %1412 = vmatprep.subr.bf16.mxu0 0
    %1413 = vmatpush2.bf16.msra.mxu0 0
    %1414 = vmatprep.subr.bf16.mxu0 0
    %1415 = vmatpush2.bf16.msra.mxu0 0
    %1416 = vmatprep.mubr.bf16.mxu0 0
    %1417 = vmatmul.mubr.bf16.gmra.mxu0 %v1213
    %v1418 = vpop.f32.mrf.mxu0
    %v1419 = vadd.f32 0.0, %v1418
    %v1420 = vpop.f32.mrf.mxu0
    %v1421 = vpop.f32.mrf.mxu0
    %v1422 = vpop.f32.mrf.mxu0
    %1423 = vdwg.mxu0
    %v1425 = vrot.slane %v1419, 6
    %v1427 = vadd.f32 %v114, %v1425
    %v1428 = vxor.u32 %v1427, 2147483648
    %v1429 = vmul.f32 %v1428, 1.442695
    %v1430 = vpow.pop %v1429
    %v1431 = vadd.f32 %v1430, 1.0
    %v1432 = vrcp.pop %v1431
    %v1433 = vmul.f32 1.0, %v1432
    %v1434 = vtanh.pop %v1427
    %v1436 = vrot.slane %v1201, 6
    %v1438 = vmul.f32 %v1433, %v1436
    %1440 = vrot.lane.b32.xlu0 %v1434, 32
    %v1441 = vpop.permute.xlu0 %1440
    %v1443 = vmul.f32 %v1433, %v1441
    %1445 = vrot.lane.b32.xlu0 %v1443, 32
    %v1446 = vpop.permute.xlu0 %1445
    %v1448 = vadd.f32 %v1438, %v1446
    %v1449 = vtanh.pop %v1448
    %1451 = vrot.lane.b32.xlu0 %v1449, 32
    %v1452 = vpop.permute.xlu0 %1451
    %v1454 = vmul.f32 %v1433, %v1452
    %v1455 = vpack.c.bf16 %v1454, %v1454
    %v1457 = vrot.slane %v1455, 1
    %1458 = vrot.lane.b32.xlu0 %v1457, 64
    %v1459 = vpop.permute.xlu0 %1458
    %v1461 = vsel %vm129, %v1459, 0
    %1463 = vmatprep.subr.bf16.mxu0 0
    %1464 = vmatpush1.bf16.msra.mxu0 0
    %1465 = vmatprep.subr.bf16.mxu0 0
    %1466 = vmatpush1.bf16.msra.mxu0 0
    %1467 = vmatprep.subr.bf16.mxu0 0
    %1468 = vmatpush1.bf16.msra.mxu0 0
    %1469 = vmatprep.subr.bf16.mxu0 0
    %1470 = vmatpush1.bf16.msra.mxu0 0
    %1471 = vmatprep.subr.bf16.mxu0 0
    %1472 = vmatpush1.bf16.msra.mxu0 0
    %1473 = vmatprep.subr.bf16.mxu0 0
    %1474 = vmatpush1.bf16.msra.mxu0 0
    %1475 = vmatprep.subr.bf16.mxu0 0
    %1476 = vmatpush1.bf16.msra.mxu0 %v211
    %1477 = vmatprep.subr.bf16.mxu0 0
    %1478 = vmatpush1.bf16.msra.mxu0 %v210
    %1479 = vmatprep.subr.bf16.mxu0 0
    %1480 = vmatpush2.bf16.msra.mxu0 0
    %1481 = vmatprep.subr.bf16.mxu0 0
    %1482 = vmatpush2.bf16.msra.mxu0 0
    %1483 = vmatprep.subr.bf16.mxu0 0
    %1484 = vmatpush2.bf16.msra.mxu0 0
    %1485 = vmatprep.subr.bf16.mxu0 0
    %1486 = vmatpush2.bf16.msra.mxu0 0
    %1487 = vmatprep.subr.bf16.mxu0 0
    %1488 = vmatpush2.bf16.msra.mxu0 0
    %1489 = vmatprep.subr.bf16.mxu0 0
    %1490 = vmatpush2.bf16.msra.mxu0 0
    %1491 = vmatprep.subr.bf16.mxu0 0
    %1492 = vmatpush2.bf16.msra.mxu0 0
    %1493 = vmatprep.subr.bf16.mxu0 0
    %1494 = vmatpush2.bf16.msra.mxu0 0
    %1495 = vmatprep.mubr.bf16.mxu0 0
    %1496 = vmatmul.mubr.bf16.gmra.mxu0 %v1461
    %v1497 = vpop.f32.mrf.mxu0
    %v1498 = vadd.f32 %v51, %v1497
    %v1499 = vpop.f32.mrf.mxu0
    %v1500 = vpop.f32.mrf.mxu0
    %v1501 = vpop.f32.mrf.mxu0
    %1502 = vdwg.mxu0
    %1503 = vmatprep.subr.bf16.mxu0 0
    %1504 = vmatpush1.bf16.msra.mxu0 0
    %1505 = vmatprep.subr.bf16.mxu0 0
    %1506 = vmatpush1.bf16.msra.mxu0 0
    %1507 = vmatprep.subr.bf16.mxu0 0
    %1508 = vmatpush1.bf16.msra.mxu0 0
    %1509 = vmatprep.subr.bf16.mxu0 0
    %1510 = vmatpush1.bf16.msra.mxu0 0
    %1511 = vmatprep.subr.bf16.mxu0 0
    %1512 = vmatpush1.bf16.msra.mxu0 0
    %1513 = vmatprep.subr.bf16.mxu0 0
    %1514 = vmatpush1.bf16.msra.mxu0 0
    %1515 = vmatprep.subr.bf16.mxu0 0
    %1516 = vmatpush1.bf16.msra.mxu0 %v266
    %1517 = vmatprep.subr.bf16.mxu0 0
    %1518 = vmatpush1.bf16.msra.mxu0 %v265
    %1519 = vmatprep.subr.bf16.mxu0 0
    %1520 = vmatpush2.bf16.msra.mxu0 0
    %1521 = vmatprep.subr.bf16.mxu0 0
    %1522 = vmatpush2.bf16.msra.mxu0 0
    %1523 = vmatprep.subr.bf16.mxu0 0
    %1524 = vmatpush2.bf16.msra.mxu0 0
    %1525 = vmatprep.subr.bf16.mxu0 0
    %1526 = vmatpush2.bf16.msra.mxu0 0
    %1527 = vmatprep.subr.bf16.mxu0 0
    %1528 = vmatpush2.bf16.msra.mxu0 0
    %1529 = vmatprep.subr.bf16.mxu0 0
    %1530 = vmatpush2.bf16.msra.mxu0 0
    %1531 = vmatprep.subr.bf16.mxu0 0
    %1532 = vmatpush2.bf16.msra.mxu0 0
    %1533 = vmatprep.subr.bf16.mxu0 0
    %1534 = vmatpush2.bf16.msra.mxu0 0
    %1535 = vmatprep.mubr.bf16.mxu0 0
    %1536 = vmatmul.mubr.bf16.gmra.mxu0 %v1341
    %v1537 = vpop.f32.mrf.mxu0
    %v1538 = vadd.f32 0.0, %v1537
    %v1539 = vpop.f32.mrf.mxu0
    %v1540 = vpop.f32.mrf.mxu0
    %v1541 = vpop.f32.mrf.mxu0
    %1542 = vdwg.mxu0
    %v1543 = vadd.f32 %v1498, %v1538
    %v1544 = vxor.u32 %v1543, 2147483648
    %v1545 = vmul.f32 %v1544, 1.442695
    %v1546 = vpow.pop %v1545
    %v1547 = vadd.f32 %v1546, 1.0
    %v1548 = vrcp.pop %v1547
    %v1549 = vmul.f32 1.0, %v1548
    %v1550 = vtanh.pop %v1543
    %v1551 = vmul.f32 %v1549, %v1313
    %1553 = vrot.lane.b32.xlu0 %v1550, 32
    %v1554 = vpop.permute.xlu0 %1553
    %v1556 = vmul.f32 %v1549, %v1554
    %1558 = vrot.lane.b32.xlu0 %v1556, 32
    %v1559 = vpop.permute.xlu0 %1558
    %v1561 = vadd.f32 %v1551, %v1559
    %v1562 = vtanh.pop %v1561
    %1564 = vrot.lane.b32.xlu0 %v1562, 32
    %v1565 = vpop.permute.xlu0 %1564
    %v1567 = vmul.f32 %v1549, %v1565
    %v1568 = vpack.c.bf16 %v1567, %v1567
    %v1569 = vld [vmem:[%s7 + $0x50] sm:$0xf]
    %v1570 = vld [vmem:[%s7 + $0x54] sm:$0xf]
    %v1571 = vld [vmem:[%s7 + $0x58] sm:$0xf]
    %v1572 = vld [vmem:[%s7 + $0x5c] sm:$0xf]
    %1574 = vrot.lane.b32.xlu0 %v1568, 64
    %v1575 = vpop.permute.xlu0 %1574
    %v1580 = vunpack.c.l.b16 %v1569
    %v1581 = vunpack.c.l.b16 %v1570
    %v1582 = vunpack.c.l.b16 %v1571
    %v1583 = vunpack.c.l.b16 %v1572
    %v1584 = vpack.c.b16 %v1581, %v1580
    %v1585 = vpack.c.b16 %v1583, %v1582
    %v1589 = vsel %vm129, %v1575, 0
    %1591 = vmatprep.subr.bf16.mxu0 0
    %1592 = vmatpush1.bf16.msra.mxu0 0
    %1593 = vmatprep.subr.bf16.mxu0 0
    %1594 = vmatpush1.bf16.msra.mxu0 0
    %1595 = vmatprep.subr.bf16.mxu0 0
    %1596 = vmatpush1.bf16.msra.mxu0 0
    %1597 = vmatprep.subr.bf16.mxu0 0
    %1598 = vmatpush1.bf16.msra.mxu0 0
    %1599 = vmatprep.subr.bf16.mxu0 0
    %1600 = vmatpush1.bf16.msra.mxu0 0
    %1601 = vmatprep.subr.bf16.mxu0 0
    %1602 = vmatpush1.bf16.msra.mxu0 0
    %1603 = vmatprep.subr.bf16.mxu0 0
    %1604 = vmatpush1.bf16.msra.mxu0 %v1585
    %1605 = vmatprep.subr.bf16.mxu0 0
    %1606 = vmatpush1.bf16.msra.mxu0 %v1584
    %1607 = vmatprep.subr.bf16.mxu0 0
    %1608 = vmatpush2.bf16.msra.mxu0 0
    %1609 = vmatprep.subr.bf16.mxu0 0
    %1610 = vmatpush2.bf16.msra.mxu0 0
    %1611 = vmatprep.subr.bf16.mxu0 0
    %1612 = vmatpush2.bf16.msra.mxu0 0
    %1613 = vmatprep.subr.bf16.mxu0 0
    %1614 = vmatpush2.bf16.msra.mxu0 0
    %1615 = vmatprep.subr.bf16.mxu0 0
    %1616 = vmatpush2.bf16.msra.mxu0 0
    %1617 = vmatprep.subr.bf16.mxu0 0
    %1618 = vmatpush2.bf16.msra.mxu0 0
    %1619 = vmatprep.subr.bf16.mxu0 0
    %1620 = vmatpush2.bf16.msra.mxu0 0
    %1621 = vmatprep.subr.bf16.mxu0 0
    %1622 = vmatpush2.bf16.msra.mxu0 0
    %1623 = vmatprep.mubr.bf16.mxu0 0
    %1624 = vmatmul.mubr.bf16.gmra.mxu0 %v1589
    %v1625 = vpop.f32.mrf.mxu0
    %v1626 = vadd.f32 0.0, %v1625
    %v1627 = vpop.f32.mrf.mxu0
    %v1628 = vpop.f32.mrf.mxu0
    %v1629 = vpop.f32.mrf.mxu0
    %1630 = vdwg.mxu0
    %v1631 = vadd.f32 %v1383, %v1626
    %1632 = vmatprep.subr.bf16.mxu0 0
    %1633 = vmatpush1.bf16.msra.mxu0 0
    %1634 = vmatprep.subr.bf16.mxu0 0
    %1635 = vmatpush1.bf16.msra.mxu0 0
    %1636 = vmatprep.subr.bf16.mxu0 0
    %1637 = vmatpush1.bf16.msra.mxu0 0
    %1638 = vmatprep.subr.bf16.mxu0 0
    %1639 = vmatpush1.bf16.msra.mxu0 0
    %1640 = vmatprep.subr.bf16.mxu0 0
    %1641 = vmatpush1.bf16.msra.mxu0 0
    %1642 = vmatprep.subr.bf16.mxu0 0
    %1643 = vmatpush1.bf16.msra.mxu0 0
    %1644 = vmatprep.subr.bf16.mxu0 0
    %1645 = vmatpush1.bf16.msra.mxu0 %v126
    %1646 = vmatprep.subr.bf16.mxu0 0
    %1647 = vmatpush1.bf16.msra.mxu0 %v125
    %1648 = vmatprep.subr.bf16.mxu0 0
    %1649 = vmatpush2.bf16.msra.mxu0 0
    %1650 = vmatprep.subr.bf16.mxu0 0
    %1651 = vmatpush2.bf16.msra.mxu0 0
    %1652 = vmatprep.subr.bf16.mxu0 0
    %1653 = vmatpush2.bf16.msra.mxu0 0
    %1654 = vmatprep.subr.bf16.mxu0 0
    %1655 = vmatpush2.bf16.msra.mxu0 0
    %1656 = vmatprep.subr.bf16.mxu0 0
    %1657 = vmatpush2.bf16.msra.mxu0 0
    %1658 = vmatprep.subr.bf16.mxu0 0
    %1659 = vmatpush2.bf16.msra.mxu0 0
    %1660 = vmatprep.subr.bf16.mxu0 0
    %1661 = vmatpush2.bf16.msra.mxu0 0
    %1662 = vmatprep.subr.bf16.mxu0 0
    %1663 = vmatpush2.bf16.msra.mxu0 0
    %1664 = vmatprep.mubr.bf16.mxu0 0
    %1665 = vmatmul.mubr.bf16.gmra.mxu0 %v1461
    %v1666 = vpop.f32.mrf.mxu0
    %v1667 = vadd.f32 0.0, %v1666
    %v1668 = vpop.f32.mrf.mxu0
    %v1669 = vpop.f32.mrf.mxu0
    %v1670 = vpop.f32.mrf.mxu0
    %1671 = vdwg.mxu0
    %v1673 = vrot.slane %v1667, 4
    %v1675 = vadd.f32 %v114, %v1673
    %v1676 = vxor.u32 %v1675, 2147483648
    %v1677 = vmul.f32 %v1676, 1.442695
    %v1678 = vpow.pop %v1677
    %v1679 = vadd.f32 %v1678, 1.0
    %v1680 = vrcp.pop %v1679
    %v1681 = vmul.f32 1.0, %v1680
    %v1682 = vtanh.pop %v1675
    %v1684 = vrot.slane %v1448, 6
    %v1686 = vmul.f32 %v1681, %v1684
    %1688 = vrot.lane.b32.xlu0 %v1682, 32
    %v1689 = vpop.permute.xlu0 %1688
    %v1691 = vmul.f32 %v1681, %v1689
    %1693 = vrot.lane.b32.xlu0 %v1691, 32
    %v1694 = vpop.permute.xlu0 %1693
    %v1696 = vadd.f32 %v1686, %v1694
    %v1697 = vtanh.pop %v1696
    %1699 = vrot.lane.b32.xlu0 %v1697, 32
    %v1700 = vpop.permute.xlu0 %1699
    %v1702 = vmul.f32 %v1681, %v1700
    %v1703 = vpack.c.bf16 %v1702, %v1702
    %v1705 = vrot.slane %v1703, 2
    %1706 = vrot.lane.b32.xlu0 %v1705, 64
    %v1707 = vpop.permute.xlu0 %1706
    %v1709 = vsel %vm129, %v1707, 0
    %1711 = vmatprep.subr.bf16.mxu0 0
    %1712 = vmatpush1.bf16.msra.mxu0 0
    %1713 = vmatprep.subr.bf16.mxu0 0
    %1714 = vmatpush1.bf16.msra.mxu0 0
    %1715 = vmatprep.subr.bf16.mxu0 0
    %1716 = vmatpush1.bf16.msra.mxu0 0
    %1717 = vmatprep.subr.bf16.mxu0 0
    %1718 = vmatpush1.bf16.msra.mxu0 0
    %1719 = vmatprep.subr.bf16.mxu0 0
    %1720 = vmatpush1.bf16.msra.mxu0 0
    %1721 = vmatprep.subr.bf16.mxu0 0
    %1722 = vmatpush1.bf16.msra.mxu0 0
    %1723 = vmatprep.subr.bf16.mxu0 0
    %1724 = vmatpush1.bf16.msra.mxu0 %v211
    %1725 = vmatprep.subr.bf16.mxu0 0
    %1726 = vmatpush1.bf16.msra.mxu0 %v210
    %1727 = vmatprep.subr.bf16.mxu0 0
    %1728 = vmatpush2.bf16.msra.mxu0 0
    %1729 = vmatprep.subr.bf16.mxu0 0
    %1730 = vmatpush2.bf16.msra.mxu0 0
    %1731 = vmatprep.subr.bf16.mxu0 0
    %1732 = vmatpush2.bf16.msra.mxu0 0
    %1733 = vmatprep.subr.bf16.mxu0 0
    %1734 = vmatpush2.bf16.msra.mxu0 0
    %1735 = vmatprep.subr.bf16.mxu0 0
    %1736 = vmatpush2.bf16.msra.mxu0 0
    %1737 = vmatprep.subr.bf16.mxu0 0
    %1738 = vmatpush2.bf16.msra.mxu0 0
    %1739 = vmatprep.subr.bf16.mxu0 0
    %1740 = vmatpush2.bf16.msra.mxu0 0
    %1741 = vmatprep.subr.bf16.mxu0 0
    %1742 = vmatpush2.bf16.msra.mxu0 0
    %1743 = vmatprep.mubr.bf16.mxu0 0
    %1744 = vmatmul.mubr.bf16.gmra.mxu0 %v1709
    %v1745 = vpop.f32.mrf.mxu0
    %v1746 = vadd.f32 %v51, %v1745
    %v1747 = vpop.f32.mrf.mxu0
    %v1748 = vpop.f32.mrf.mxu0
    %v1749 = vpop.f32.mrf.mxu0
    %1750 = vdwg.mxu0
    %1751 = vmatprep.subr.bf16.mxu0 0
    %1752 = vmatpush1.bf16.msra.mxu0 0
    %1753 = vmatprep.subr.bf16.mxu0 0
    %1754 = vmatpush1.bf16.msra.mxu0 0
    %1755 = vmatprep.subr.bf16.mxu0 0
    %1756 = vmatpush1.bf16.msra.mxu0 0
    %1757 = vmatprep.subr.bf16.mxu0 0
    %1758 = vmatpush1.bf16.msra.mxu0 0
    %1759 = vmatprep.subr.bf16.mxu0 0
    %1760 = vmatpush1.bf16.msra.mxu0 0
    %1761 = vmatprep.subr.bf16.mxu0 0
    %1762 = vmatpush1.bf16.msra.mxu0 0
    %1763 = vmatprep.subr.bf16.mxu0 0
    %1764 = vmatpush1.bf16.msra.mxu0 %v266
    %1765 = vmatprep.subr.bf16.mxu0 0
    %1766 = vmatpush1.bf16.msra.mxu0 %v265
    %1767 = vmatprep.subr.bf16.mxu0 0
    %1768 = vmatpush2.bf16.msra.mxu0 0
    %1769 = vmatprep.subr.bf16.mxu0 0
    %1770 = vmatpush2.bf16.msra.mxu0 0
    %1771 = vmatprep.subr.bf16.mxu0 0
    %1772 = vmatpush2.bf16.msra.mxu0 0
    %1773 = vmatprep.subr.bf16.mxu0 0
    %1774 = vmatpush2.bf16.msra.mxu0 0
    %1775 = vmatprep.subr.bf16.mxu0 0
    %1776 = vmatpush2.bf16.msra.mxu0 0
    %1777 = vmatprep.subr.bf16.mxu0 0
    %1778 = vmatpush2.bf16.msra.mxu0 0
    %1779 = vmatprep.subr.bf16.mxu0 0
    %1780 = vmatpush2.bf16.msra.mxu0 0
    %1781 = vmatprep.subr.bf16.mxu0 0
    %1782 = vmatpush2.bf16.msra.mxu0 0
    %1783 = vmatprep.mubr.bf16.mxu0 0
    %1784 = vmatmul.mubr.bf16.gmra.mxu0 %v1589
    %v1785 = vpop.f32.mrf.mxu0
    %v1786 = vadd.f32 0.0, %v1785
    %v1787 = vpop.f32.mrf.mxu0
    %v1788 = vpop.f32.mrf.mxu0
    %v1789 = vpop.f32.mrf.mxu0
    %1790 = vdwg.mxu0
    %v1791 = vadd.f32 %v1746, %v1786
    %v1792 = vxor.u32 %v1791, 2147483648
    %v1793 = vmul.f32 %v1792, 1.442695
    %v1794 = vpow.pop %v1793
    %v1795 = vadd.f32 %v1794, 1.0
    %v1796 = vrcp.pop %v1795
    %v1797 = vmul.f32 1.0, %v1796
    %v1798 = vtanh.pop %v1791
    %v1799 = vmul.f32 %v1797, %v1561
    %1801 = vrot.lane.b32.xlu0 %v1798, 32
    %v1802 = vpop.permute.xlu0 %1801
    %v1804 = vmul.f32 %v1797, %v1802
    %1806 = vrot.lane.b32.xlu0 %v1804, 32
    %v1807 = vpop.permute.xlu0 %1806
    %v1809 = vadd.f32 %v1799, %v1807
    %v1810 = vtanh.pop %v1809
    %1812 = vrot.lane.b32.xlu0 %v1810, 32
    %v1813 = vpop.permute.xlu0 %1812
    %v1815 = vmul.f32 %v1797, %v1813
    %v1816 = vpack.c.bf16 %v1815, %v1815
    %v1817 = vld [vmem:[%s7 + $0x60] sm:$0xf]
    %v1818 = vld [vmem:[%s7 + $0x64] sm:$0xf]
    %v1819 = vld [vmem:[%s7 + $0x68] sm:$0xf]
    %v1820 = vld [vmem:[%s7 + $0x6c] sm:$0xf]
    %1822 = vrot.lane.b32.xlu0 %v1816, 64
    %v1823 = vpop.permute.xlu0 %1822
    %v1828 = vunpack.c.l.b16 %v1817
    %v1829 = vunpack.c.l.b16 %v1818
    %v1830 = vunpack.c.l.b16 %v1819
    %v1831 = vunpack.c.l.b16 %v1820
    %v1832 = vpack.c.b16 %v1829, %v1828
    %v1833 = vpack.c.b16 %v1831, %v1830
    %v1837 = vsel %vm129, %v1823, 0
    %1839 = vmatprep.subr.bf16.mxu0 0
    %1840 = vmatpush1.bf16.msra.mxu0 0
    %1841 = vmatprep.subr.bf16.mxu0 0
    %1842 = vmatpush1.bf16.msra.mxu0 0
    %1843 = vmatprep.subr.bf16.mxu0 0
    %1844 = vmatpush1.bf16.msra.mxu0 0
    %1845 = vmatprep.subr.bf16.mxu0 0
    %1846 = vmatpush1.bf16.msra.mxu0 0
    %1847 = vmatprep.subr.bf16.mxu0 0
    %1848 = vmatpush1.bf16.msra.mxu0 0
    %1849 = vmatprep.subr.bf16.mxu0 0
    %1850 = vmatpush1.bf16.msra.mxu0 0
    %1851 = vmatprep.subr.bf16.mxu0 0
    %1852 = vmatpush1.bf16.msra.mxu0 %v1833
    %1853 = vmatprep.subr.bf16.mxu0 0
    %1854 = vmatpush1.bf16.msra.mxu0 %v1832
    %1855 = vmatprep.subr.bf16.mxu0 0
    %1856 = vmatpush2.bf16.msra.mxu0 0
    %1857 = vmatprep.subr.bf16.mxu0 0
    %1858 = vmatpush2.bf16.msra.mxu0 0
    %1859 = vmatprep.subr.bf16.mxu0 0
    %1860 = vmatpush2.bf16.msra.mxu0 0
    %1861 = vmatprep.subr.bf16.mxu0 0
    %1862 = vmatpush2.bf16.msra.mxu0 0
    %1863 = vmatprep.subr.bf16.mxu0 0
    %1864 = vmatpush2.bf16.msra.mxu0 0
    %1865 = vmatprep.subr.bf16.mxu0 0
    %1866 = vmatpush2.bf16.msra.mxu0 0
    %1867 = vmatprep.subr.bf16.mxu0 0
    %1868 = vmatpush2.bf16.msra.mxu0 0
    %1869 = vmatprep.subr.bf16.mxu0 0
    %1870 = vmatpush2.bf16.msra.mxu0 0
    %1871 = vmatprep.mubr.bf16.mxu0 0
    %1872 = vmatmul.mubr.bf16.gmra.mxu0 %v1837
    %v1873 = vpop.f32.mrf.mxu0
    %v1874 = vadd.f32 0.0, %v1873
    %v1875 = vpop.f32.mrf.mxu0
    %v1876 = vpop.f32.mrf.mxu0
    %v1877 = vpop.f32.mrf.mxu0
    %1878 = vdwg.mxu0
    %v1879 = vadd.f32 %v1631, %v1874
    %1880 = vmatprep.subr.bf16.mxu0 0
    %1881 = vmatpush1.bf16.msra.mxu0 0
    %1882 = vmatprep.subr.bf16.mxu0 0
    %1883 = vmatpush1.bf16.msra.mxu0 0
    %1884 = vmatprep.subr.bf16.mxu0 0
    %1885 = vmatpush1.bf16.msra.mxu0 0
    %1886 = vmatprep.subr.bf16.mxu0 0
    %1887 = vmatpush1.bf16.msra.mxu0 0
    %1888 = vmatprep.subr.bf16.mxu0 0
    %1889 = vmatpush1.bf16.msra.mxu0 0
    %1890 = vmatprep.subr.bf16.mxu0 0
    %1891 = vmatpush1.bf16.msra.mxu0 0
    %1892 = vmatprep.subr.bf16.mxu0 0
    %1893 = vmatpush1.bf16.msra.mxu0 %v126
    %1894 = vmatprep.subr.bf16.mxu0 0
    %1895 = vmatpush1.bf16.msra.mxu0 %v125
    %1896 = vmatprep.subr.bf16.mxu0 0
    %1897 = vmatpush2.bf16.msra.mxu0 0
    %1898 = vmatprep.subr.bf16.mxu0 0
    %1899 = vmatpush2.bf16.msra.mxu0 0
    %1900 = vmatprep.subr.bf16.mxu0 0
    %1901 = vmatpush2.bf16.msra.mxu0 0
    %1902 = vmatprep.subr.bf16.mxu0 0
    %1903 = vmatpush2.bf16.msra.mxu0 0
    %1904 = vmatprep.subr.bf16.mxu0 0
    %1905 = vmatpush2.bf16.msra.mxu0 0
    %1906 = vmatprep.subr.bf16.mxu0 0
    %1907 = vmatpush2.bf16.msra.mxu0 0
    %1908 = vmatprep.subr.bf16.mxu0 0
    %1909 = vmatpush2.bf16.msra.mxu0 0
    %1910 = vmatprep.subr.bf16.mxu0 0
    %1911 = vmatpush2.bf16.msra.mxu0 0
    %1912 = vmatprep.mubr.bf16.mxu0 0
    %1913 = vmatmul.mubr.bf16.gmra.mxu0 %v1709
    %v1914 = vpop.f32.mrf.mxu0
    %v1915 = vadd.f32 0.0, %v1914
    %v1916 = vpop.f32.mrf.mxu0
    %v1917 = vpop.f32.mrf.mxu0
    %v1918 = vpop.f32.mrf.mxu0
    %1919 = vdwg.mxu0
    %v1921 = vrot.slane %v1915, 2
    %v1923 = vadd.f32 %v114, %v1921
    %v1924 = vxor.u32 %v1923, 2147483648
    %v1925 = vmul.f32 %v1924, 1.442695
    %v1926 = vpow.pop %v1925
    %v1927 = vadd.f32 %v1926, 1.0
    %v1928 = vrcp.pop %v1927
    %v1929 = vmul.f32 1.0, %v1928
    %v1930 = vtanh.pop %v1923
    %v1932 = vrot.slane %v1696, 6
    %v1934 = vmul.f32 %v1929, %v1932
    %1936 = vrot.lane.b32.xlu0 %v1930, 32
    %v1937 = vpop.permute.xlu0 %1936
    %v1939 = vmul.f32 %v1929, %v1937
    %1941 = vrot.lane.b32.xlu0 %v1939, 32
    %v1942 = vpop.permute.xlu0 %1941
    %v1944 = vadd.f32 %v1934, %v1942
    %v1945 = vtanh.pop %v1944
    %1947 = vrot.lane.b32.xlu0 %v1945, 32
    %v1948 = vpop.permute.xlu0 %1947
    %v1950 = vmul.f32 %v1929, %v1948
    %v1951 = vpack.c.bf16 %v1950, %v1950
    %v1953 = vrot.slane %v1951, 3
    %1954 = vrot.lane.b32.xlu0 %v1953, 64
    %v1955 = vpop.permute.xlu0 %1954
    %v1957 = vsel %vm129, %v1955, 0
    %1959 = vmatprep.subr.bf16.mxu0 0
    %1960 = vmatpush1.bf16.msra.mxu0 0
    %1961 = vmatprep.subr.bf16.mxu0 0
    %1962 = vmatpush1.bf16.msra.mxu0 0
    %1963 = vmatprep.subr.bf16.mxu0 0
    %1964 = vmatpush1.bf16.msra.mxu0 0
    %1965 = vmatprep.subr.bf16.mxu0 0
    %1966 = vmatpush1.bf16.msra.mxu0 0
    %1967 = vmatprep.subr.bf16.mxu0 0
    %1968 = vmatpush1.bf16.msra.mxu0 0
    %1969 = vmatprep.subr.bf16.mxu0 0
    %1970 = vmatpush1.bf16.msra.mxu0 0
    %1971 = vmatprep.subr.bf16.mxu0 0
    %1972 = vmatpush1.bf16.msra.mxu0 %v211
    %1973 = vmatprep.subr.bf16.mxu0 0
    %1974 = vmatpush1.bf16.msra.mxu0 %v210
    %1975 = vmatprep.subr.bf16.mxu0 0
    %1976 = vmatpush2.bf16.msra.mxu0 0
    %1977 = vmatprep.subr.bf16.mxu0 0
    %1978 = vmatpush2.bf16.msra.mxu0 0
    %1979 = vmatprep.subr.bf16.mxu0 0
    %1980 = vmatpush2.bf16.msra.mxu0 0
    %1981 = vmatprep.subr.bf16.mxu0 0
    %1982 = vmatpush2.bf16.msra.mxu0 0
    %1983 = vmatprep.subr.bf16.mxu0 0
    %1984 = vmatpush2.bf16.msra.mxu0 0
    %1985 = vmatprep.subr.bf16.mxu0 0
    %1986 = vmatpush2.bf16.msra.mxu0 0
    %1987 = vmatprep.subr.bf16.mxu0 0
    %1988 = vmatpush2.bf16.msra.mxu0 0
    %1989 = vmatprep.subr.bf16.mxu0 0
    %1990 = vmatpush2.bf16.msra.mxu0 0
    %1991 = vmatprep.mubr.bf16.mxu0 0
    %1992 = vmatmul.mubr.bf16.gmra.mxu0 %v1957
    %v1993 = vpop.f32.mrf.mxu0
    %v1994 = vadd.f32 %v51, %v1993
    %v1995 = vpop.f32.mrf.mxu0
    %v1996 = vpop.f32.mrf.mxu0
    %v1997 = vpop.f32.mrf.mxu0
    %1998 = vdwg.mxu0
    %1999 = vmatprep.subr.bf16.mxu0 0
    %2000 = vmatpush1.bf16.msra.mxu0 0
    %2001 = vmatprep.subr.bf16.mxu0 0
    %2002 = vmatpush1.bf16.msra.mxu0 0
    %2003 = vmatprep.subr.bf16.mxu0 0
    %2004 = vmatpush1.bf16.msra.mxu0 0
    %2005 = vmatprep.subr.bf16.mxu0 0
    %2006 = vmatpush1.bf16.msra.mxu0 0
    %2007 = vmatprep.subr.bf16.mxu0 0
    %2008 = vmatpush1.bf16.msra.mxu0 0
    %2009 = vmatprep.subr.bf16.mxu0 0
    %2010 = vmatpush1.bf16.msra.mxu0 0
    %2011 = vmatprep.subr.bf16.mxu0 0
    %2012 = vmatpush1.bf16.msra.mxu0 %v266
    %2013 = vmatprep.subr.bf16.mxu0 0
    %2014 = vmatpush1.bf16.msra.mxu0 %v265
    %2015 = vmatprep.subr.bf16.mxu0 0
    %2016 = vmatpush2.bf16.msra.mxu0 0
    %2017 = vmatprep.subr.bf16.mxu0 0
    %2018 = vmatpush2.bf16.msra.mxu0 0
    %2019 = vmatprep.subr.bf16.mxu0 0
    %2020 = vmatpush2.bf16.msra.mxu0 0
    %2021 = vmatprep.subr.bf16.mxu0 0
    %2022 = vmatpush2.bf16.msra.mxu0 0
    %2023 = vmatprep.subr.bf16.mxu0 0
    %2024 = vmatpush2.bf16.msra.mxu0 0
    %2025 = vmatprep.subr.bf16.mxu0 0
    %2026 = vmatpush2.bf16.msra.mxu0 0
    %2027 = vmatprep.subr.bf16.mxu0 0
    %2028 = vmatpush2.bf16.msra.mxu0 0
    %2029 = vmatprep.subr.bf16.mxu0 0
    %2030 = vmatpush2.bf16.msra.mxu0 0
    %2031 = vmatprep.mubr.bf16.mxu0 0
    %2032 = vmatmul.mubr.bf16.gmra.mxu0 %v1837
    %v2033 = vpop.f32.mrf.mxu0
    %v2034 = vadd.f32 0.0, %v2033
    %v2035 = vpop.f32.mrf.mxu0
    %v2036 = vpop.f32.mrf.mxu0
    %v2037 = vpop.f32.mrf.mxu0
    %2038 = vdwg.mxu0
    %v2039 = vadd.f32 %v1994, %v2034
    %v2040 = vxor.u32 %v2039, 2147483648
    %v2041 = vmul.f32 %v2040, 1.442695
    %v2042 = vpow.pop %v2041
    %v2043 = vadd.f32 %v2042, 1.0
    %v2044 = vrcp.pop %v2043
    %v2045 = vmul.f32 1.0, %v2044
    %v2046 = vtanh.pop %v2039
    %v2047 = vmul.f32 %v2045, %v1809
    %2049 = vrot.lane.b32.xlu0 %v2046, 32
    %v2050 = vpop.permute.xlu0 %2049
    %v2052 = vmul.f32 %v2045, %v2050
    %2054 = vrot.lane.b32.xlu0 %v2052, 32
    %v2055 = vpop.permute.xlu0 %2054
    %v2057 = vadd.f32 %v2047, %v2055
    %v2058 = vtanh.pop %v2057
    %2060 = vrot.lane.b32.xlu0 %v2058, 32
    %v2061 = vpop.permute.xlu0 %2060
    %v2063 = vmul.f32 %v2045, %v2061
    %v2064 = vpack.c.bf16 %v2063, %v2063
    %v2065 = vld [vmem:[%s7 + $0x70] sm:$0xf]
    %v2066 = vld [vmem:[%s7 + $0x74] sm:$0xf]
    %v2067 = vld [vmem:[%s7 + $0x78] sm:$0xf]
    %v2068 = vld [vmem:[%s7 + $0x7c] sm:$0xf]
    %2070 = vrot.lane.b32.xlu0 %v2064, 64
    %v2071 = vpop.permute.xlu0 %2070
    %v2076 = vunpack.c.l.b16 %v2065
    %v2077 = vunpack.c.l.b16 %v2066
    %v2078 = vunpack.c.l.b16 %v2067
    %v2079 = vunpack.c.l.b16 %v2068
    %v2080 = vpack.c.b16 %v2077, %v2076
    %v2081 = vpack.c.b16 %v2079, %v2078
    %v2085 = vsel %vm129, %v2071, 0
    %2087 = vmatprep.subr.bf16.mxu0 0
    %2088 = vmatpush1.bf16.msra.mxu0 0
    %2089 = vmatprep.subr.bf16.mxu0 0
    %2090 = vmatpush1.bf16.msra.mxu0 0
    %2091 = vmatprep.subr.bf16.mxu0 0
    %2092 = vmatpush1.bf16.msra.mxu0 0
    %2093 = vmatprep.subr.bf16.mxu0 0
    %2094 = vmatpush1.bf16.msra.mxu0 0
    %2095 = vmatprep.subr.bf16.mxu0 0
    %2096 = vmatpush1.bf16.msra.mxu0 0
    %2097 = vmatprep.subr.bf16.mxu0 0
    %2098 = vmatpush1.bf16.msra.mxu0 0
    %2099 = vmatprep.subr.bf16.mxu0 0
    %2100 = vmatpush1.bf16.msra.mxu0 %v2081
    %2101 = vmatprep.subr.bf16.mxu0 0
    %2102 = vmatpush1.bf16.msra.mxu0 %v2080
    %2103 = vmatprep.subr.bf16.mxu0 0
    %2104 = vmatpush2.bf16.msra.mxu0 0
    %2105 = vmatprep.subr.bf16.mxu0 0
    %2106 = vmatpush2.bf16.msra.mxu0 0
    %2107 = vmatprep.subr.bf16.mxu0 0
    %2108 = vmatpush2.bf16.msra.mxu0 0
    %2109 = vmatprep.subr.bf16.mxu0 0
    %2110 = vmatpush2.bf16.msra.mxu0 0
    %2111 = vmatprep.subr.bf16.mxu0 0
    %2112 = vmatpush2.bf16.msra.mxu0 0
    %2113 = vmatprep.subr.bf16.mxu0 0
    %2114 = vmatpush2.bf16.msra.mxu0 0
    %2115 = vmatprep.subr.bf16.mxu0 0
    %2116 = vmatpush2.bf16.msra.mxu0 0
    %2117 = vmatprep.subr.bf16.mxu0 0
    %2118 = vmatpush2.bf16.msra.mxu0 0
    %2119 = vmatprep.mubr.bf16.mxu0 0
    %2120 = vmatmul.mubr.bf16.gmra.mxu0 %v2085
    %v2121 = vpop.f32.mrf.mxu0
    %v2122 = vadd.f32 0.0, %v2121
    %v2123 = vpop.f32.mrf.mxu0
    %v2124 = vpop.f32.mrf.mxu0
    %v2125 = vpop.f32.mrf.mxu0
    %2126 = vdwg.mxu0
    %v2127 = vadd.f32 %v1879, %v2122
    %v2128 = vld [vmem:[%s8] sm:$0x1]
    %v2130 = vlaneseq
    %v2131 = vshrl.u32 %v2130, 7
    %v2132 = vsub.s32 0, %v2131
    %v2133 = vrot.slane %v2128, %v2132
    %v2135 = vadd.f32 %v2127, %v2133
    %vm2136 = vcmask 25600
    %2137 = vst.msk [vmem:[#allocation2] sm:$0x3] %vm2136, %v2135
    // Predicated region
    $region38: #{tpu_custom_call.1} parent=1 // pred_check
      _
    $region39: #{tpu_custom_call.1} parent=1 // pred_check_branch
      %2139 = sbr.rel (0) target = $region41
    $region40: #{tpu_custom_call.1} parent=1 // pred_region
      %s2141 = ssub.s32 32, 32
      %2142 = vsyncadd [#allocation3], %s2141
      %s2144 = sshll.u32 [#allocation2], 4
      %s2145 = int_to_ptr.vmem [resolvable:$true] %s2144
      %2147 = dma.vmem_to_hbm [thread:$0]  %s2145, 32, %s9, [#allocation3]
    $region41: #{tpu_custom_call.1} parent=1 // pred_fallthru
      _
    // Predicated region
    $region42: #{tpu_custom_call.1} parent=1 // pred_check
      _
    $region43: #{tpu_custom_call.1} parent=1 // pred_check_branch
      %2149 = sbr.rel (0) target = $region45
    $region44: #{tpu_custom_call.1} parent=1 // pred_region
      %2150 = dma.done [#allocation3], 32
    $region45: #{tpu_custom_call.1} parent=1 // pred_fallthru
      _
    %2151 = vsyncpa [#allocation3], 1

</llo_original>
